<compile_context>
chip_gen: v5e
topology: v5e:2x2
jax: 0.10.0
libtpu: 0.0.40
codegen_flags: <defaults>
</compile_context>

<pallas_src>
import jax
import jax.numpy as jnp
from jax.experimental import pallas as pl
from jax.experimental.pallas import tpu as pltpu

# ---------------------------------------------------------------------------
# Model hyper-parameters (small, consistent with the module's __init__).
# ---------------------------------------------------------------------------
B = 2         # batch
T = 8         # sequence length
D = 16        # input_dim
H = 32        # hidden_dim
C = 2         # num_classes
NUM_LAYERS = 2
FC_PAD = 128  # lane-dense padded FC output width


# ---------------------------------------------------------------------------
# Pallas kernel: full bidirectional 2-layer LSTM + FC head, fused.
# ---------------------------------------------------------------------------
def rnn_classifier_kernel(
    x_ref,             # (T*B, D)            time-major flattened input
    w0_ref, b0_ref,    # (D, 8H), (1, 8H)    layer-0 input proj, fwd|bwd packed on lanes
    whh0_ref,          # (2H, 4H)            vstack(whh0f, whh0b) block weight
    w1_ref, b1_ref,    # (2H, 8H), (1, 8H)   layer-1 input proj, hstack(wih1f, wih1b)
    whh1f_ref,         # (H, 4H)             layer-1 fwd hidden-hidden
    fcw_ref, fcb_ref,  # (2H, 128), (1, 128) zero-padded FC head
    out_ref,           # (B, 128)
    pg0_scr,           # (T*B, 8H)  scratch: layer-0 pre-gates (both directions)
    y1f_scr,           # (T*B, H)   scratch: layer-0 forward hidden per t
    y1b_scr,           # (T*B, H)   scratch: layer-0 backward hidden per t
    pg1_scr,           # (T*B, 8H)  scratch: layer-1 pre-gates (both directions)
):
  f32 = jnp.float32

  def lstm_cell(gates, c_prev):
    # gates: (M, 4H) pre-activations, gate order i, f, g, o.
    # 2 EUP pushes over the full gate tile + 1 for tanh(c_new).
    sig = jax.nn.sigmoid(gates)
    tnh = jnp.tanh(gates)
    i_g = sig[:, 0 * H:1 * H]
    f_g = sig[:, 1 * H:2 * H]
    g_g = tnh[:, 2 * H:3 * H]
    o_g = sig[:, 3 * H:4 * H]
    c_new = f_g * c_prev + i_g * g_g
    h_new = o_g * jnp.tanh(c_new)
    return h_new, c_new

  # ---- layer-0 input projection: ONE (T*B, D) @ (D, 8H) matmul into VMEM scratch ----
  pg0_scr[...] = (
      jnp.dot(x_ref[...], w0_ref[...], preferred_element_type=f32) + b0_ref[...]
  )

  # ---- layer 0: forward & backward recurrences fused via sublane-stacked state ----
  # State rows 0:B = forward direction, rows B:2B = backward direction.
  whh0 = whh0_ref[...]                                          # loaded once
  row_ids = jax.lax.broadcasted_iota(jnp.int32, (2 * B, 2 * H), 0)
  lane_ids = jax.lax.broadcasted_iota(jnp.int32, (2 * B, 2 * H), 1)
  blk_mask = (row_ids < B) == (lane_ids < H)                    # block-diag LHS mask

  h = jnp.zeros((2 * B, H), f32)
  c = jnp.zeros((2 * B, H), f32)
  for s in range(T):
    tf = s
    tb = T - 1 - s
    pre_f = pg0_scr[tf * B:(tf + 1) * B, 0:4 * H]               # (B, 4H) fwd @ t = tf
    pre_b = pg0_scr[tb * B:(tb + 1) * B, 4 * H:8 * H]           # (B, 4H) bwd @ t = tb
    gates = jnp.concatenate([pre_f, pre_b], axis=0)             # (2B, 4H)
    if s > 0:  # h == 0 at s == 0, so the hidden matmul contributes nothing
      # Block LHS [hf | 0 ; 0 | hb]: ONE MXU push covers both directions.
      lhs = jnp.where(blk_mask, jnp.concatenate([h, h], axis=1), 0.0)  # (2B, 2H)
      gates = gates + jnp.dot(lhs, whh0, preferred_element_type=f32)
    h, c = lstm_cell(gates, c)
    y1f_scr[tf * B:(tf + 1) * B, :] = h[0:B]
    y1b_scr[tb * B:(tb + 1) * B, :] = h[B:2 * B]

  # ---- layer-1 input projection: ONE (T*B, 2H) @ (2H, 8H) matmul into VMEM scratch ----
  y01 = jnp.concatenate([y1f_scr[...], y1b_scr[...]], axis=1)   # (T*B, 2H)
  pg1_scr[...] = (
      jnp.dot(y01, w1_ref[...], preferred_element_type=f32) + b1_ref[...]
  )

  zeros_bh = jnp.zeros((B, H), f32)

  # ---- layer-1 backward: only t = T-1 is needed (single step from zero state,
  #      so W_hh of this direction never contributes) ----
  h1b, _ = lstm_cell(pg1_scr[(T - 1) * B:T * B, 4 * H:8 * H], zeros_bh)

  # ---- layer-1 forward: full recurrence, only the final hidden is needed ----
  whh1 = whh1f_ref[...]                                         # loaded once
  h1f, c1f = zeros_bh, zeros_bh
  for t in range(T):
    g = pg1_scr[t * B:(t + 1) * B, 0:4 * H]
    if t > 0:
      g = g + jnp.dot(h1f, whh1, preferred_element_type=f32)
    h1f, c1f = lstm_cell(g, c1f)

  # ---- FC head on concat(h1f, h1b) via split, zero-padded (lane-dense) weights ----
  out_ref[...] = (
      jnp.dot(h1f, fcw_ref[0:H, :], preferred_element_type=f32)
      + jnp.dot(h1b, fcw_ref[H:2 * H, :], preferred_element_type=f32)
      + fcb_ref[...]
  )


def _full_spec(shape):
  ndim = len(shape)
  return pl.BlockSpec(shape, lambda i, _n=ndim: (0,) * _n)


# ---------------------------------------------------------------------------
# One-time parameter packing (NOT per forward call).
# ---------------------------------------------------------------------------
def prepare_params(p):
  w0 = jnp.concatenate([p["wih0f"], p["wih0b"]], axis=1)        # (D, 8H)
  b0 = jnp.concatenate([p["b0f"], p["b0b"]], axis=1)            # (1, 8H)
  whh0 = jnp.concatenate([p["whh0f"], p["whh0b"]], axis=0)      # (2H, 4H) block rows
  w1 = jnp.concatenate([p["wih1f"], p["wih1b"]], axis=1)        # (2H, 8H)
  b1 = jnp.concatenate([p["b1f"], p["b1b"]], axis=1)            # (1, 8H)
  fcw = jnp.zeros((2 * H, FC_PAD), jnp.float32).at[:, :C].set(p["fcw"])
  fcb = jnp.zeros((1, FC_PAD), jnp.float32).at[:, :C].set(p["fcb"])
  return (w0, b0, whh0, w1, b1, p["whh1f"], fcw, fcb)


def rnn_classifier_forward(x_btd, packed):
  """x_btd: (B, T, D) float32; packed: output of prepare_params.  Returns (B, C) logits."""
  x_flat = jnp.transpose(x_btd, (1, 0, 2)).reshape(T * B, D)    # time-major, flattened
  inputs = (x_flat,) + tuple(packed)
  in_specs = [_full_spec(a.shape) for a in inputs]

  out = pl.pallas_call(
      rnn_classifier_kernel,
      out_shape=jax.ShapeDtypeStruct((B, FC_PAD), jnp.float32),
      grid=(1,),
      in_specs=in_specs,
      out_specs=_full_spec((B, FC_PAD)),
      scratch_shapes=[
          pltpu.VMEM((T * B, 8 * H), jnp.float32),   # pg0
          pltpu.VMEM((T * B, H), jnp.float32),       # y1f
          pltpu.VMEM((T * B, H), jnp.float32),       # y1b
          pltpu.VMEM((T * B, 8 * H), jnp.float32),   # pg1
      ],
      compiler_params=pltpu.CompilerParams(dimension_semantics=("arbitrary",)),
  )(*inputs)
  return out[:, :C]


# ---------------------------------------------------------------------------
# Deterministic parameter init (PyTorch-style uniform(-1/sqrt(H), 1/sqrt(H))).
# Gate order i, f, g, o; b = b_ih + b_hh folded into one bias per direction.
# ---------------------------------------------------------------------------
def init_params(key):
  k = 1.0 / jnp.sqrt(jnp.float32(H))

  def u(kk, shape):
    return jax.random.uniform(kk, shape, jnp.float32, -k, k)

  names_shapes = [
      ("wih0f", (D, 4 * H)), ("whh0f", (H, 4 * H)), ("b0f", (1, 4 * H)),
      ("wih0b", (D, 4 * H)), ("whh0b", (H, 4 * H)), ("b0b", (1, 4 * H)),
      ("wih1f", (2 * H, 4 * H)), ("whh1f", (H, 4 * H)), ("b1f", (1, 4 * H)),
      ("wih1b", (2 * H, 4 * H)), ("whh1b", (H, 4 * H)), ("b1b", (1, 4 * H)),
      ("fcw", (2 * H, C)), ("fcb", (1, C)),
  ]
  keys = jax.random.split(key, len(names_shapes))
  return {name: u(kk, shape) for kk, (name, shape) in zip(keys, names_shapes)}


# ---------------------------------------------------------------------------
# Pure-JAX reference (same math) for a correctness check.
# ---------------------------------------------------------------------------
def lstm_dir_ref(x, wih, whh, b, reverse):
  ts = range(T - 1, -1, -1) if reverse else range(T)
  h = jnp.zeros((B, H), jnp.float32)
  c = jnp.zeros((B, H), jnp.float32)
  ys = [None] * T
  for t in ts:
    gates = x[:, t, :] @ wih + h @ whh + b
    i_g = jax.nn.sigmoid(gates[:, 0 * H:1 * H])
    f_g = jax.nn.sigmoid(gates[:, 1 * H:2 * H])
    g_g = jnp.tanh(gates[:, 2 * H:3 * H])
    o_g = jax.nn.sigmoid(gates[:, 3 * H:4 * H])
    c = f_g * c + i_g * g_g
    h = o_g * jnp.tanh(c)
    ys[t] = h
  return jnp.stack(ys, axis=1)  # (B, T, H)


def reference_forward(x, p):
  y1f = lstm_dir_ref(x, p["wih0f"], p["whh0f"], p["b0f"], False)
  y1b = lstm_dir_ref(x, p["wih0b"], p["whh0b"], p["b0b"], True)
  x1 = jnp.concatenate([y1f, y1b], axis=-1)
  y2f = lstm_dir_ref(x1, p["wih1f"], p["whh1f"], p["b1f"], False)
  y2b = lstm_dir_ref(x1, p["wih1b"], p["whh1b"], p["b1b"], True)
  last = jnp.concatenate([y2f[:, -1, :], y2b[:, -1, :]], axis=-1)
  return last @ p["fcw"] + p["fcb"]


if __name__ == "__main__":
  key = jax.random.PRNGKey(0)
  kx, kp = jax.random.split(key)
  x = jax.random.normal(kx, (B, T, D), jnp.float32)
  params = init_params(kp)
  packed = prepare_params(params)   # one-time weight packing, outside the per-call path

  logits = rnn_classifier_forward(x, packed)
  logits = jax.block_until_ready(logits)

  ref = reference_forward(x, params)
  assert logits.shape == (B, C), logits.shape
  assert jnp.allclose(logits, ref, atol=2e-3, rtol=2e-3), (logits, ref)

  print("KERNEL_OK")
</pallas_src>

<mosaic_0001>
module attributes {stable_mosaic.version = 11 : i64} {
  func.func @rnn_classifier_kernel(%arg0: i32, %arg1: memref<16x16xf32, #tpu.memory_space<vmem>>, %arg2: memref<16x256xf32, #tpu.memory_space<vmem>>, %arg3: memref<1x256xf32, #tpu.memory_space<vmem>>, %arg4: memref<64x128xf32, #tpu.memory_space<vmem>>, %arg5: memref<64x256xf32, #tpu.memory_space<vmem>>, %arg6: memref<1x256xf32, #tpu.memory_space<vmem>>, %arg7: memref<32x128xf32, #tpu.memory_space<vmem>>, %arg8: memref<64x128xf32, #tpu.memory_space<vmem>>, %arg9: memref<1x128xf32, #tpu.memory_space<vmem>>, %arg10: memref<2x128xf32, #tpu.memory_space<vmem>>, %arg11: memref<16x256xf32, #tpu.memory_space<vmem>>, %arg12: memref<16x32xf32, #tpu.memory_space<vmem>>, %arg13: memref<16x32xf32, #tpu.memory_space<vmem>>, %arg14: memref<16x256xf32, #tpu.memory_space<vmem>>) attributes {dimension_semantics = [#tpu.dimension_semantics<arbitrary>], iteration_bounds = array<i64: 1>, scalar_prefetch = 0 : i64, scratch_operands = 4 : i64, tpu.core_type = #tpu.core_type<tc>, window_params = [{pipeline_mode = #tpu.pipeline_mode<synchronous>, transform_indices = @transform_0, window_bounds = array<i64: 16, 16>}, {pipeline_mode = #tpu.pipeline_mode<synchronous>, transform_indices = @transform_1, window_bounds = array<i64: 16, 256>}, {pipeline_mode = #tpu.pipeline_mode<synchronous>, transform_indices = @transform_2, window_bounds = array<i64: 1, 256>}, {pipeline_mode = #tpu.pipeline_mode<synchronous>, transform_indices = @transform_3, window_bounds = array<i64: 64, 128>}, {pipeline_mode = #tpu.pipeline_mode<synchronous>, transform_indices = @transform_4, window_bounds = array<i64: 64, 256>}, {pipeline_mode = #tpu.pipeline_mode<synchronous>, transform_indices = @transform_5, window_bounds = array<i64: 1, 256>}, {pipeline_mode = #tpu.pipeline_mode<synchronous>, transform_indices = @transform_6, window_bounds = array<i64: 32, 128>}, {pipeline_mode = #tpu.pipeline_mode<synchronous>, transform_indices = @transform_7, window_bounds = array<i64: 64, 128>}, {pipeline_mode = #tpu.pipeline_mode<synchronous>, transform_indices = @transform_8, window_bounds = array<i64: 1, 128>}, {pipeline_mode = #tpu.pipeline_mode<synchronous>, transform_indices = @transform_9, window_bounds = array<i64: 2, 128>}]} {
    %c0 = arith.constant 0 : index
    %c0_0 = arith.constant 0 : index
    %0 = vector.load %arg1[%c0, %c0_0] : memref<16x16xf32, #tpu.memory_space<vmem>>, vector<16x16xf32>
    %c0_1 = arith.constant 0 : index
    %c0_2 = arith.constant 0 : index
    %1 = vector.load %arg2[%c0_1, %c0_2] : memref<16x256xf32, #tpu.memory_space<vmem>>, vector<16x256xf32>
    %cst = arith.constant dense<0.000000e+00> : vector<16x256xf32>
    %2 = tpu.matmul %0, %1, %cst {dimension_numbers = #tpu.dot_dimension_numbers<[1], [0], [0], [1], [0, 0, 1, 1], [], []>} : vector<16x16xf32>, vector<16x256xf32>, vector<16x256xf32> -> vector<16x256xf32>
    %c0_3 = arith.constant 0 : index
    %c0_4 = arith.constant 0 : index
    %3 = vector.load %arg3[%c0_3, %c0_4] : memref<1x256xf32, #tpu.memory_space<vmem>>, vector<1x256xf32>
    %4 = vector.broadcast %3 : vector<1x256xf32> to vector<16x256xf32>
    %5 = arith.addf %2, %4 : vector<16x256xf32>
    %c0_5 = arith.constant 0 : index
    %c0_6 = arith.constant 0 : index
    %6 = vector.load %arg11[%c0_5, %c0_6] : memref<16x256xf32, #tpu.memory_space<vmem>>, vector<16x256xf32>
    tpu.vector_store %arg11[%c0_5, %c0_6], %5 {strides = array<i32>} : memref<16x256xf32, #tpu.memory_space<vmem>>, vector<16x256xf32>,
    %c0_7 = arith.constant 0 : index
    %c0_8 = arith.constant 0 : index
    %7 = vector.load %arg4[%c0_7, %c0_8] : memref<64x128xf32, #tpu.memory_space<vmem>>, vector<64x128xf32>
    %8 = tpu.iota {dimensions = array<i32: 0>} : vector<4x64xi32>
    %9 = tpu.iota {dimensions = array<i32: 1>} : vector<4x64xi32>
    %c2_i32 = arith.constant 2 : i32
    %10 = vector.broadcast %c2_i32 : i32 to vector<4x64xi32>
    %11 = arith.cmpi slt, %8, %10 : vector<4x64xi32>
    %c32_i32 = arith.constant 32 : i32
    %12 = vector.broadcast %c32_i32 : i32 to vector<4x64xi32>
    %13 = arith.cmpi slt, %9, %12 : vector<4x64xi32>
    %14 = arith.xori %11, %13 : vector<4x64xi1>
    %cst_9 = arith.constant dense<true> : vector<4x64xi1>
    %15 = arith.xori %14, %cst_9 : vector<4x64xi1>
    %cst_10 = arith.constant 0.000000e+00 : f32
    %16 = vector.broadcast %cst_10 : f32 to vector<4x32xf32>
    %c0_11 = arith.constant 0 : index
    %c0_12 = arith.constant 0 : index
    %17 = vector.load %arg11[%c0_11, %c0_12] : memref<16x256xf32, #tpu.memory_space<vmem>>, vector<2x128xf32>
    %c14 = arith.constant 14 : index
    %c128 = arith.constant 128 : index
    %18 = vector.load %arg11[%c14, %c128] : memref<16x256xf32, #tpu.memory_space<vmem>>, vector<2x128xf32>
    %19 = tpu.concatenate %17, %18 in 0 : vector<2x128xf32>, vector<2x128xf32> -> vector<4x128xf32>
    %20 = arith.negf %19 : vector<4x128xf32>
    %21 = math.exp %20 : vector<4x128xf32>
    %cst_13 = arith.constant 1.000000e+00 : f32
    %22 = vector.broadcast %cst_13 : f32 to vector<4x128xf32>
    %23 = arith.addf %22, %21 : vector<4x128xf32>
    %24 = arith.divf %22, %23 : vector<4x128xf32>
    %25 = math.tanh %19 : vector<4x128xf32>
    %26 = vector.extract_strided_slice %24 {offsets = [0, 0], sizes = [4, 32], strides = [1, 1]} : vector<4x128xf32> to vector<4x32xf32>
    %27 = vector.extract_strided_slice %24 {offsets = [0, 32], sizes = [4, 32], strides = [1, 1]} : vector<4x128xf32> to vector<4x32xf32>
    %28 = vector.extract_strided_slice %25 {offsets = [0, 64], sizes = [4, 32], strides = [1, 1]} : vector<4x128xf32> to vector<4x32xf32>
    %29 = vector.extract_strided_slice %24 {offsets = [0, 96], sizes = [4, 32], strides = [1, 1]} : vector<4x128xf32> to vector<4x32xf32>
    %30 = arith.mulf %27, %16 : vector<4x32xf32>
    %31 = arith.mulf %26, %28 : vector<4x32xf32>
    %32 = arith.addf %30, %31 : vector<4x32xf32>
    %33 = math.tanh %32 : vector<4x32xf32>
    %34 = arith.mulf %29, %33 : vector<4x32xf32>
    %35 = vector.extract_strided_slice %34 {offsets = [0, 0], sizes = [2, 32], strides = [1, 1]} : vector<4x32xf32> to vector<2x32xf32>
    %c0_14 = arith.constant 0 : index
    %c0_15 = arith.constant 0 : index
    %36 = vector.load %arg12[%c0_14, %c0_15] : memref<16x32xf32, #tpu.memory_space<vmem>>, vector<2x32xf32>
    tpu.vector_store %arg12[%c0_14, %c0_15], %35 {strides = array<i32>} : memref<16x32xf32, #tpu.memory_space<vmem>>, vector<2x32xf32>,
    %37 = vector.extract_strided_slice %34 {offsets = [2, 0], sizes = [2, 32], strides = [1, 1]} : vector<4x32xf32> to vector<2x32xf32>
    %c14_16 = arith.constant 14 : index
    %c0_17 = arith.constant 0 : index
    %38 = vector.load %arg13[%c14_16, %c0_17] : memref<16x32xf32, #tpu.memory_space<vmem>>, vector<2x32xf32>
    tpu.vector_store %arg13[%c14_16, %c0_17], %37 {strides = array<i32>} : memref<16x32xf32, #tpu.memory_space<vmem>>, vector<2x32xf32>,
    %c2 = arith.constant 2 : index
    %c0_18 = arith.constant 0 : index
    %39 = vector.load %arg11[%c2, %c0_18] : memref<16x256xf32, #tpu.memory_space<vmem>>, vector<2x128xf32>
    %c12 = arith.constant 12 : index
    %c128_19 = arith.constant 128 : index
    %40 = vector.load %arg11[%c12, %c128_19] : memref<16x256xf32, #tpu.memory_space<vmem>>, vector<2x128xf32>
    %41 = tpu.concatenate %39, %40 in 0 : vector<2x128xf32>, vector<2x128xf32> -> vector<4x128xf32>
    %42 = tpu.concatenate %34, %34 in 1 : vector<4x32xf32>, vector<4x32xf32> -> vector<4x64xf32>
    %cst_20 = arith.constant 0.000000e+00 : f32
    %43 = vector.broadcast %cst_20 : f32 to vector<4x64xf32>
    %44 = arith.select %15, %42, %43 : vector<4x64xi1>, vector<4x64xf32>
    %cst_21 = arith.constant dense<0.000000e+00> : vector<4x128xf32>
    %45 = tpu.matmul %44, %7, %cst_21 {dimension_numbers = #tpu.dot_dimension_numbers<[1], [0], [0], [1], [0, 0, 1, 1], [], []>} : vector<4x64xf32>, vector<64x128xf32>, vector<4x128xf32> -> vector<4x128xf32>
    %46 = arith.addf %41, %45 : vector<4x128xf32>
    %47 = arith.negf %46 : vector<4x128xf32>
    %48 = math.exp %47 : vector<4x128xf32>
    %cst_22 = arith.constant 1.000000e+00 : f32
    %49 = vector.broadcast %cst_22 : f32 to vector<4x128xf32>
    %50 = arith.addf %49, %48 : vector<4x128xf32>
    %51 = arith.divf %49, %50 : vector<4x128xf32>
    %52 = math.tanh %46 : vector<4x128xf32>
    %53 = vector.extract_strided_slice %51 {offsets = [0, 0], sizes = [4, 32], strides = [1, 1]} : vector<4x128xf32> to vector<4x32xf32>
    %54 = vector.extract_strided_slice %51 {offsets = [0, 32], sizes = [4, 32], strides = [1, 1]} : vector<4x128xf32> to vector<4x32xf32>
    %55 = vector.extract_strided_slice %52 {offsets = [0, 64], sizes = [4, 32], strides = [1, 1]} : vector<4x128xf32> to vector<4x32xf32>
    %56 = vector.extract_strided_slice %51 {offsets = [0, 96], sizes = [4, 32], strides = [1, 1]} : vector<4x128xf32> to vector<4x32xf32>
    %57 = arith.mulf %54, %32 : vector<4x32xf32>
    %58 = arith.mulf %53, %55 : vector<4x32xf32>
    %59 = arith.addf %57, %58 : vector<4x32xf32>
    %60 = math.tanh %59 : vector<4x32xf32>
    %61 = arith.mulf %56, %60 : vector<4x32xf32>
    %62 = vector.extract_strided_slice %61 {offsets = [0, 0], sizes = [2, 32], strides = [1, 1]} : vector<4x32xf32> to vector<2x32xf32>
    %c2_23 = arith.constant 2 : index
    %c0_24 = arith.constant 0 : index
    %63 = vector.load %arg12[%c2_23, %c0_24] : memref<16x32xf32, #tpu.memory_space<vmem>>, vector<2x32xf32>
    tpu.vector_store %arg12[%c2_23, %c0_24], %62 {strides = array<i32>} : memref<16x32xf32, #tpu.memory_space<vmem>>, vector<2x32xf32>,
    %64 = vector.extract_strided_slice %61 {offsets = [2, 0], sizes = [2, 32], strides = [1, 1]} : vector<4x32xf32> to vector<2x32xf32>
    %c12_25 = arith.constant 12 : index
    %c0_26 = arith.constant 0 : index
    %65 = vector.load %arg13[%c12_25, %c0_26] : memref<16x32xf32, #tpu.memory_space<vmem>>, vector<2x32xf32>
    tpu.vector_store %arg13[%c12_25, %c0_26], %64 {strides = array<i32>} : memref<16x32xf32, #tpu.memory_space<vmem>>, vector<2x32xf32>,
    %c4 = arith.constant 4 : index
    %c0_27 = arith.constant 0 : index
    %66 = vector.load %arg11[%c4, %c0_27] : memref<16x256xf32, #tpu.memory_space<vmem>>, vector<2x128xf32>
    %c10 = arith.constant 10 : index
    %c128_28 = arith.constant 128 : index
    %67 = vector.load %arg11[%c10, %c128_28] : memref<16x256xf32, #tpu.memory_space<vmem>>, vector<2x128xf32>
    %68 = tpu.concatenate %66, %67 in 0 : vector<2x128xf32>, vector<2x128xf32> -> vector<4x128xf32>
    %69 = tpu.concatenate %61, %61 in 1 : vector<4x32xf32>, vector<4x32xf32> -> vector<4x64xf32>
    %cst_29 = arith.constant 0.000000e+00 : f32
    %70 = vector.broadcast %cst_29 : f32 to vector<4x64xf32>
    %71 = arith.select %15, %69, %70 : vector<4x64xi1>, vector<4x64xf32>
    %cst_30 = arith.constant dense<0.000000e+00> : vector<4x128xf32>
    %72 = tpu.matmul %71, %7, %cst_30 {dimension_numbers = #tpu.dot_dimension_numbers<[1], [0], [0], [1], [0, 0, 1, 1], [], []>} : vector<4x64xf32>, vector<64x128xf32>, vector<4x128xf32> -> vector<4x128xf32>
    %73 = arith.addf %68, %72 : vector<4x128xf32>
    %74 = arith.negf %73 : vector<4x128xf32>
    %75 = math.exp %74 : vector<4x128xf32>
    %cst_31 = arith.constant 1.000000e+00 : f32
    %76 = vector.broadcast %cst_31 : f32 to vector<4x128xf32>
    %77 = arith.addf %76, %75 : vector<4x128xf32>
    %78 = arith.divf %76, %77 : vector<4x128xf32>
    %79 = math.tanh %73 : vector<4x128xf32>
    %80 = vector.extract_strided_slice %78 {offsets = [0, 0], sizes = [4, 32], strides = [1, 1]} : vector<4x128xf32> to vector<4x32xf32>
    %81 = vector.extract_strided_slice %78 {offsets = [0, 32], sizes = [4, 32], strides = [1, 1]} : vector<4x128xf32> to vector<4x32xf32>
    %82 = vector.extract_strided_slice %79 {offsets = [0, 64], sizes = [4, 32], strides = [1, 1]} : vector<4x128xf32> to vector<4x32xf32>
    %83 = vector.extract_strided_slice %78 {offsets = [0, 96], sizes = [4, 32], strides = [1, 1]} : vector<4x128xf32> to vector<4x32xf32>
    %84 = arith.mulf %81, %59 : vector<4x32xf32>
    %85 = arith.mulf %80, %82 : vector<4x32xf32>
    %86 = arith.addf %84, %85 : vector<4x32xf32>
    %87 = math.tanh %86 : vector<4x32xf32>
    %88 = arith.mulf %83, %87 : vector<4x32xf32>
    %89 = vector.extract_strided_slice %88 {offsets = [0, 0], sizes = [2, 32], strides = [1, 1]} : vector<4x32xf32> to vector<2x32xf32>
    %c4_32 = arith.constant 4 : index
    %c0_33 = arith.constant 0 : index
    %90 = vector.load %arg12[%c4_32, %c0_33] : memref<16x32xf32, #tpu.memory_space<vmem>>, vector<2x32xf32>
    tpu.vector_store %arg12[%c4_32, %c0_33], %89 {strides = array<i32>} : memref<16x32xf32, #tpu.memory_space<vmem>>, vector<2x32xf32>,
    %91 = vector.extract_strided_slice %88 {offsets = [2, 0], sizes = [2, 32], strides = [1, 1]} : vector<4x32xf32> to vector<2x32xf32>
    %c10_34 = arith.constant 10 : index
    %c0_35 = arith.constant 0 : index
    %92 = vector.load %arg13[%c10_34, %c0_35] : memref<16x32xf32, #tpu.memory_space<vmem>>, vector<2x32xf32>
    tpu.vector_store %arg13[%c10_34, %c0_35], %91 {strides = array<i32>} : memref<16x32xf32, #tpu.memory_space<vmem>>, vector<2x32xf32>,
    %c6 = arith.constant 6 : index
    %c0_36 = arith.constant 0 : index
    %93 = vector.load %arg11[%c6, %c0_36] : memref<16x256xf32, #tpu.memory_space<vmem>>, vector<2x128xf32>
    %c8 = arith.constant 8 : index
    %c128_37 = arith.constant 128 : index
    %94 = vector.load %arg11[%c8, %c128_37] : memref<16x256xf32, #tpu.memory_space<vmem>>, vector<2x128xf32>
    %95 = tpu.concatenate %93, %94 in 0 : vector<2x128xf32>, vector<2x128xf32> -> vector<4x128xf32>
    %96 = tpu.concatenate %88, %88 in 1 : vector<4x32xf32>, vector<4x32xf32> -> vector<4x64xf32>
    %cst_38 = arith.constant 0.000000e+00 : f32
    %97 = vector.broadcast %cst_38 : f32 to vector<4x64xf32>
    %98 = arith.select %15, %96, %97 : vector<4x64xi1>, vector<4x64xf32>
    %cst_39 = arith.constant dense<0.000000e+00> : vector<4x128xf32>
    %99 = tpu.matmul %98, %7, %cst_39 {dimension_numbers = #tpu.dot_dimension_numbers<[1], [0], [0], [1], [0, 0, 1, 1], [], []>} : vector<4x64xf32>, vector<64x128xf32>, vector<4x128xf32> -> vector<4x128xf32>
    %100 = arith.addf %95, %99 : vector<4x128xf32>
    %101 = arith.negf %100 : vector<4x128xf32>
    %102 = math.exp %101 : vector<4x128xf32>
    %cst_40 = arith.constant 1.000000e+00 : f32
    %103 = vector.broadcast %cst_40 : f32 to vector<4x128xf32>
    %104 = arith.addf %103, %102 : vector<4x128xf32>
    %105 = arith.divf %103, %104 : vector<4x128xf32>
    %106 = math.tanh %100 : vector<4x128xf32>
    %107 = vector.extract_strided_slice %105 {offsets = [0, 0], sizes = [4, 32], strides = [1, 1]} : vector<4x128xf32> to vector<4x32xf32>
    %108 = vector.extract_strided_slice %105 {offsets = [0, 32], sizes = [4, 32], strides = [1, 1]} : vector<4x128xf32> to vector<4x32xf32>
    %109 = vector.extract_strided_slice %106 {offsets = [0, 64], sizes = [4, 32], strides = [1, 1]} : vector<4x128xf32> to vector<4x32xf32>
    %110 = vector.extract_strided_slice %105 {offsets = [0, 96], sizes = [4, 32], strides = [1, 1]} : vector<4x128xf32> to vector<4x32xf32>
    %111 = arith.mulf %108, %86 : vector<4x32xf32>
    %112 = arith.mulf %107, %109 : vector<4x32xf32>
    %113 = arith.addf %111, %112 : vector<4x32xf32>
    %114 = math.tanh %113 : vector<4x32xf32>
    %115 = arith.mulf %110, %114 : vector<4x32xf32>
    %116 = vector.extract_strided_slice %115 {offsets = [0, 0], sizes = [2, 32], strides = [1, 1]} : vector<4x32xf32> to vector<2x32xf32>
    %c6_41 = arith.constant 6 : index
    %c0_42 = arith.constant 0 : index
    %117 = vector.load %arg12[%c6_41, %c0_42] : memref<16x32xf32, #tpu.memory_space<vmem>>, vector<2x32xf32>
    tpu.vector_store %arg12[%c6_41, %c0_42], %116 {strides = array<i32>} : memref<16x32xf32, #tpu.memory_space<vmem>>, vector<2x32xf32>,
    %118 = vector.extract_strided_slice %115 {offsets = [2, 0], sizes = [2, 32], strides = [1, 1]} : vector<4x32xf32> to vector<2x32xf32>
    %c8_43 = arith.constant 8 : index
    %c0_44 = arith.constant 0 : index
    %119 = vector.load %arg13[%c8_43, %c0_44] : memref<16x32xf32, #tpu.memory_space<vmem>>, vector<2x32xf32>
    tpu.vector_store %arg13[%c8_43, %c0_44], %118 {strides = array<i32>} : memref<16x32xf32, #tpu.memory_space<vmem>>, vector<2x32xf32>,
    %c8_45 = arith.constant 8 : index
    %c0_46 = arith.constant 0 : index
    %120 = vector.load %arg11[%c8_45, %c0_46] : memref<16x256xf32, #tpu.memory_space<vmem>>, vector<2x128xf32>
    %c6_47 = arith.constant 6 : index
    %c128_48 = arith.constant 128 : index
    %121 = vector.load %arg11[%c6_47, %c128_48] : memref<16x256xf32, #tpu.memory_space<vmem>>, vector<2x128xf32>
    %122 = tpu.concatenate %120, %121 in 0 : vector<2x128xf32>, vector<2x128xf32> -> vector<4x128xf32>
    %123 = tpu.concatenate %115, %115 in 1 : vector<4x32xf32>, vector<4x32xf32> -> vector<4x64xf32>
    %cst_49 = arith.constant 0.000000e+00 : f32
    %124 = vector.broadcast %cst_49 : f32 to vector<4x64xf32>
    %125 = arith.select %15, %123, %124 : vector<4x64xi1>, vector<4x64xf32>
    %cst_50 = arith.constant dense<0.000000e+00> : vector<4x128xf32>
    %126 = tpu.matmul %125, %7, %cst_50 {dimension_numbers = #tpu.dot_dimension_numbers<[1], [0], [0], [1], [0, 0, 1, 1], [], []>} : vector<4x64xf32>, vector<64x128xf32>, vector<4x128xf32> -> vector<4x128xf32>
    %127 = arith.addf %122, %126 : vector<4x128xf32>
    %128 = arith.negf %127 : vector<4x128xf32>
    %129 = math.exp %128 : vector<4x128xf32>
    %cst_51 = arith.constant 1.000000e+00 : f32
    %130 = vector.broadcast %cst_51 : f32 to vector<4x128xf32>
    %131 = arith.addf %130, %129 : vector<4x128xf32>
    %132 = arith.divf %130, %131 : vector<4x128xf32>
    %133 = math.tanh %127 : vector<4x128xf32>
    %134 = vector.extract_strided_slice %132 {offsets = [0, 0], sizes = [4, 32], strides = [1, 1]} : vector<4x128xf32> to vector<4x32xf32>
    %135 = vector.extract_strided_slice %132 {offsets = [0, 32], sizes = [4, 32], strides = [1, 1]} : vector<4x128xf32> to vector<4x32xf32>
    %136 = vector.extract_strided_slice %133 {offsets = [0, 64], sizes = [4, 32], strides = [1, 1]} : vector<4x128xf32> to vector<4x32xf32>
    %137 = vector.extract_strided_slice %132 {offsets = [0, 96], sizes = [4, 32], strides = [1, 1]} : vector<4x128xf32> to vector<4x32xf32>
    %138 = arith.mulf %135, %113 : vector<4x32xf32>
    %139 = arith.mulf %134, %136 : vector<4x32xf32>
    %140 = arith.addf %138, %139 : vector<4x32xf32>
    %141 = math.tanh %140 : vector<4x32xf32>
    %142 = arith.mulf %137, %141 : vector<4x32xf32>
    %143 = vector.extract_strided_slice %142 {offsets = [0, 0], sizes = [2, 32], strides = [1, 1]} : vector<4x32xf32> to vector<2x32xf32>
    %c8_52 = arith.constant 8 : index
    %c0_53 = arith.constant 0 : index
    %144 = vector.load %arg12[%c8_52, %c0_53] : memref<16x32xf32, #tpu.memory_space<vmem>>, vector<2x32xf32>
    tpu.vector_store %arg12[%c8_52, %c0_53], %143 {strides = array<i32>} : memref<16x32xf32, #tpu.memory_space<vmem>>, vector<2x32xf32>,
    %145 = vector.extract_strided_slice %142 {offsets = [2, 0], sizes = [2, 32], strides = [1, 1]} : vector<4x32xf32> to vector<2x32xf32>
    %c6_54 = arith.constant 6 : index
    %c0_55 = arith.constant 0 : index
    %146 = vector.load %arg13[%c6_54, %c0_55] : memref<16x32xf32, #tpu.memory_space<vmem>>, vector<2x32xf32>
    tpu.vector_store %arg13[%c6_54, %c0_55], %145 {strides = array<i32>} : memref<16x32xf32, #tpu.memory_space<vmem>>, vector<2x32xf32>,
    %c10_56 = arith.constant 10 : index
    %c0_57 = arith.constant 0 : index
    %147 = vector.load %arg11[%c10_56, %c0_57] : memref<16x256xf32, #tpu.memory_space<vmem>>, vector<2x128xf32>
    %c4_58 = arith.constant 4 : index
    %c128_59 = arith.constant 128 : index
    %148 = vector.load %arg11[%c4_58, %c128_59] : memref<16x256xf32, #tpu.memory_space<vmem>>, vector<2x128xf32>
    %149 = tpu.concatenate %147, %148 in 0 : vector<2x128xf32>, vector<2x128xf32> -> vector<4x128xf32>
    %150 = tpu.concatenate %142, %142 in 1 : vector<4x32xf32>, vector<4x32xf32> -> vector<4x64xf32>
    %cst_60 = arith.constant 0.000000e+00 : f32
    %151 = vector.broadcast %cst_60 : f32 to vector<4x64xf32>
    %152 = arith.select %15, %150, %151 : vector<4x64xi1>, vector<4x64xf32>
    %cst_61 = arith.constant dense<0.000000e+00> : vector<4x128xf32>
    %153 = tpu.matmul %152, %7, %cst_61 {dimension_numbers = #tpu.dot_dimension_numbers<[1], [0], [0], [1], [0, 0, 1, 1], [], []>} : vector<4x64xf32>, vector<64x128xf32>, vector<4x128xf32> -> vector<4x128xf32>
    %154 = arith.addf %149, %153 : vector<4x128xf32>
    %155 = arith.negf %154 : vector<4x128xf32>
    %156 = math.exp %155 : vector<4x128xf32>
    %cst_62 = arith.constant 1.000000e+00 : f32
    %157 = vector.broadcast %cst_62 : f32 to vector<4x128xf32>
    %158 = arith.addf %157, %156 : vector<4x128xf32>
    %159 = arith.divf %157, %158 : vector<4x128xf32>
    %160 = math.tanh %154 : vector<4x128xf32>
    %161 = vector.extract_strided_slice %159 {offsets = [0, 0], sizes = [4, 32], strides = [1, 1]} : vector<4x128xf32> to vector<4x32xf32>
    %162 = vector.extract_strided_slice %159 {offsets = [0, 32], sizes = [4, 32], strides = [1, 1]} : vector<4x128xf32> to vector<4x32xf32>
    %163 = vector.extract_strided_slice %160 {offsets = [0, 64], sizes = [4, 32], strides = [1, 1]} : vector<4x128xf32> to vector<4x32xf32>
    %164 = vector.extract_strided_slice %159 {offsets = [0, 96], sizes = [4, 32], strides = [1, 1]} : vector<4x128xf32> to vector<4x32xf32>
    %165 = arith.mulf %162, %140 : vector<4x32xf32>
    %166 = arith.mulf %161, %163 : vector<4x32xf32>
    %167 = arith.addf %165, %166 : vector<4x32xf32>
    %168 = math.tanh %167 : vector<4x32xf32>
    %169 = arith.mulf %164, %168 : vector<4x32xf32>
    %170 = vector.extract_strided_slice %169 {offsets = [0, 0], sizes = [2, 32], strides = [1, 1]} : vector<4x32xf32> to vector<2x32xf32>
    %c10_63 = arith.constant 10 : index
    %c0_64 = arith.constant 0 : index
    %171 = vector.load %arg12[%c10_63, %c0_64] : memref<16x32xf32, #tpu.memory_space<vmem>>, vector<2x32xf32>
    tpu.vector_store %arg12[%c10_63, %c0_64], %170 {strides = array<i32>} : memref<16x32xf32, #tpu.memory_space<vmem>>, vector<2x32xf32>,
    %172 = vector.extract_strided_slice %169 {offsets = [2, 0], sizes = [2, 32], strides = [1, 1]} : vector<4x32xf32> to vector<2x32xf32>
    %c4_65 = arith.constant 4 : index
    %c0_66 = arith.constant 0 : index
    %173 = vector.load %arg13[%c4_65, %c0_66] : memref<16x32xf32, #tpu.memory_space<vmem>>, vector<2x32xf32>
    tpu.vector_store %arg13[%c4_65, %c0_66], %172 {strides = array<i32>} : memref<16x32xf32, #tpu.memory_space<vmem>>, vector<2x32xf32>,
    %c12_67 = arith.constant 12 : index
    %c0_68 = arith.constant 0 : index
    %174 = vector.load %arg11[%c12_67, %c0_68] : memref<16x256xf32, #tpu.memory_space<vmem>>, vector<2x128xf32>
    %c2_69 = arith.constant 2 : index
    %c128_70 = arith.constant 128 : index
    %175 = vector.load %arg11[%c2_69, %c128_70] : memref<16x256xf32, #tpu.memory_space<vmem>>, vector<2x128xf32>
    %176 = tpu.concatenate %174, %175 in 0 : vector<2x128xf32>, vector<2x128xf32> -> vector<4x128xf32>
    %177 = tpu.concatenate %169, %169 in 1 : vector<4x32xf32>, vector<4x32xf32> -> vector<4x64xf32>
    %cst_71 = arith.constant 0.000000e+00 : f32
    %178 = vector.broadcast %cst_71 : f32 to vector<4x64xf32>
    %179 = arith.select %15, %177, %178 : vector<4x64xi1>, vector<4x64xf32>
    %cst_72 = arith.constant dense<0.000000e+00> : vector<4x128xf32>
    %180 = tpu.matmul %179, %7, %cst_72 {dimension_numbers = #tpu.dot_dimension_numbers<[1], [0], [0], [1], [0, 0, 1, 1], [], []>} : vector<4x64xf32>, vector<64x128xf32>, vector<4x128xf32> -> vector<4x128xf32>
    %181 = arith.addf %176, %180 : vector<4x128xf32>
    %182 = arith.negf %181 : vector<4x128xf32>
    %183 = math.exp %182 : vector<4x128xf32>
    %cst_73 = arith.constant 1.000000e+00 : f32
    %184 = vector.broadcast %cst_73 : f32 to vector<4x128xf32>
    %185 = arith.addf %184, %183 : vector<4x128xf32>
    %186 = arith.divf %184, %185 : vector<4x128xf32>
    %187 = math.tanh %181 : vector<4x128xf32>
    %188 = vector.extract_strided_slice %186 {offsets = [0, 0], sizes = [4, 32], strides = [1, 1]} : vector<4x128xf32> to vector<4x32xf32>
    %189 = vector.extract_strided_slice %186 {offsets = [0, 32], sizes = [4, 32], strides = [1, 1]} : vector<4x128xf32> to vector<4x32xf32>
    %190 = vector.extract_strided_slice %187 {offsets = [0, 64], sizes = [4, 32], strides = [1, 1]} : vector<4x128xf32> to vector<4x32xf32>
    %191 = vector.extract_strided_slice %186 {offsets = [0, 96], sizes = [4, 32], strides = [1, 1]} : vector<4x128xf32> to vector<4x32xf32>
    %192 = arith.mulf %189, %167 : vector<4x32xf32>
    %193 = arith.mulf %188, %190 : vector<4x32xf32>
    %194 = arith.addf %192, %193 : vector<4x32xf32>
    %195 = math.tanh %194 : vector<4x32xf32>
    %196 = arith.mulf %191, %195 : vector<4x32xf32>
    %197 = vector.extract_strided_slice %196 {offsets = [0, 0], sizes = [2, 32], strides = [1, 1]} : vector<4x32xf32> to vector<2x32xf32>
    %c12_74 = arith.constant 12 : index
    %c0_75 = arith.constant 0 : index
    %198 = vector.load %arg12[%c12_74, %c0_75] : memref<16x32xf32, #tpu.memory_space<vmem>>, vector<2x32xf32>
    tpu.vector_store %arg12[%c12_74, %c0_75], %197 {strides = array<i32>} : memref<16x32xf32, #tpu.memory_space<vmem>>, vector<2x32xf32>,
    %199 = vector.extract_strided_slice %196 {offsets = [2, 0], sizes = [2, 32], strides = [1, 1]} : vector<4x32xf32> to vector<2x32xf32>
    %c2_76 = arith.constant 2 : index
    %c0_77 = arith.constant 0 : index
    %200 = vector.load %arg13[%c2_76, %c0_77] : memref<16x32xf32, #tpu.memory_space<vmem>>, vector<2x32xf32>
    tpu.vector_store %arg13[%c2_76, %c0_77], %199 {strides = array<i32>} : memref<16x32xf32, #tpu.memory_space<vmem>>, vector<2x32xf32>,
    %c14_78 = arith.constant 14 : index
    %c0_79 = arith.constant 0 : index
    %201 = vector.load %arg11[%c14_78, %c0_79] : memref<16x256xf32, #tpu.memory_space<vmem>>, vector<2x128xf32>
    %c0_80 = arith.constant 0 : index
    %c128_81 = arith.constant 128 : index
    %202 = vector.load %arg11[%c0_80, %c128_81] : memref<16x256xf32, #tpu.memory_space<vmem>>, vector<2x128xf32>
    %203 = tpu.concatenate %201, %202 in 0 : vector<2x128xf32>, vector<2x128xf32> -> vector<4x128xf32>
    %204 = tpu.concatenate %196, %196 in 1 : vector<4x32xf32>, vector<4x32xf32> -> vector<4x64xf32>
    %cst_82 = arith.constant 0.000000e+00 : f32
    %205 = vector.broadcast %cst_82 : f32 to vector<4x64xf32>
    %206 = arith.select %15, %204, %205 : vector<4x64xi1>, vector<4x64xf32>
    %cst_83 = arith.constant dense<0.000000e+00> : vector<4x128xf32>
    %207 = tpu.matmul %206, %7, %cst_83 {dimension_numbers = #tpu.dot_dimension_numbers<[1], [0], [0], [1], [0, 0, 1, 1], [], []>} : vector<4x64xf32>, vector<64x128xf32>, vector<4x128xf32> -> vector<4x128xf32>
    %208 = arith.addf %203, %207 : vector<4x128xf32>
    %209 = arith.negf %208 : vector<4x128xf32>
    %210 = math.exp %209 : vector<4x128xf32>
    %cst_84 = arith.constant 1.000000e+00 : f32
    %211 = vector.broadcast %cst_84 : f32 to vector<4x128xf32>
    %212 = arith.addf %211, %210 : vector<4x128xf32>
    %213 = arith.divf %211, %212 : vector<4x128xf32>
    %214 = math.tanh %208 : vector<4x128xf32>
    %215 = vector.extract_strided_slice %213 {offsets = [0, 0], sizes = [4, 32], strides = [1, 1]} : vector<4x128xf32> to vector<4x32xf32>
    %216 = vector.extract_strided_slice %213 {offsets = [0, 32], sizes = [4, 32], strides = [1, 1]} : vector<4x128xf32> to vector<4x32xf32>
    %217 = vector.extract_strided_slice %214 {offsets = [0, 64], sizes = [4, 32], strides = [1, 1]} : vector<4x128xf32> to vector<4x32xf32>
    %218 = vector.extract_strided_slice %213 {offsets = [0, 96], sizes = [4, 32], strides = [1, 1]} : vector<4x128xf32> to vector<4x32xf32>
    %219 = arith.mulf %216, %194 : vector<4x32xf32>
    %220 = arith.mulf %215, %217 : vector<4x32xf32>
    %221 = arith.addf %219, %220 : vector<4x32xf32>
    %222 = math.tanh %221 : vector<4x32xf32>
    %223 = arith.mulf %218, %222 : vector<4x32xf32>
    %224 = vector.extract_strided_slice %223 {offsets = [0, 0], sizes = [2, 32], strides = [1, 1]} : vector<4x32xf32> to vector<2x32xf32>
    %c14_85 = arith.constant 14 : index
    %c0_86 = arith.constant 0 : index
    %225 = vector.load %arg12[%c14_85, %c0_86] : memref<16x32xf32, #tpu.memory_space<vmem>>, vector<2x32xf32>
    tpu.vector_store %arg12[%c14_85, %c0_86], %224 {strides = array<i32>} : memref<16x32xf32, #tpu.memory_space<vmem>>, vector<2x32xf32>,
    %226 = vector.extract_strided_slice %223 {offsets = [2, 0], sizes = [2, 32], strides = [1, 1]} : vector<4x32xf32> to vector<2x32xf32>
    %c0_87 = arith.constant 0 : index
    %c0_88 = arith.constant 0 : index
    %227 = vector.load %arg13[%c0_87, %c0_88] : memref<16x32xf32, #tpu.memory_space<vmem>>, vector<2x32xf32>
    tpu.vector_store %arg13[%c0_87, %c0_88], %226 {strides = array<i32>} : memref<16x32xf32, #tpu.memory_space<vmem>>, vector<2x32xf32>,
    %c0_89 = arith.constant 0 : index
    %c0_90 = arith.constant 0 : index
    %228 = vector.load %arg12[%c0_89, %c0_90] : memref<16x32xf32, #tpu.memory_space<vmem>>, vector<16x32xf32>
    %c0_91 = arith.constant 0 : index
    %c0_92 = arith.constant 0 : index
    %229 = vector.load %arg13[%c0_91, %c0_92] : memref<16x32xf32, #tpu.memory_space<vmem>>, vector<16x32xf32>
    %230 = tpu.concatenate %228, %229 in 1 : vector<16x32xf32>, vector<16x32xf32> -> vector<16x64xf32>
    %c0_93 = arith.constant 0 : index
    %c0_94 = arith.constant 0 : index
    %231 = vector.load %arg5[%c0_93, %c0_94] : memref<64x256xf32, #tpu.memory_space<vmem>>, vector<64x256xf32>
    %cst_95 = arith.constant dense<0.000000e+00> : vector<16x256xf32>
    %232 = tpu.matmul %230, %231, %cst_95 {dimension_numbers = #tpu.dot_dimension_numbers<[1], [0], [0], [1], [0, 0, 1, 1], [], []>} : vector<16x64xf32>, vector<64x256xf32>, vector<16x256xf32> -> vector<16x256xf32>
    %c0_96 = arith.constant 0 : index
    %c0_97 = arith.constant 0 : index
    %233 = vector.load %arg6[%c0_96, %c0_97] : memref<1x256xf32, #tpu.memory_space<vmem>>, vector<1x256xf32>
    %234 = vector.broadcast %233 : vector<1x256xf32> to vector<16x256xf32>
    %235 = arith.addf %232, %234 : vector<16x256xf32>
    %c0_98 = arith.constant 0 : index
    %c0_99 = arith.constant 0 : index
    %236 = vector.load %arg14[%c0_98, %c0_99] : memref<16x256xf32, #tpu.memory_space<vmem>>, vector<16x256xf32>
    tpu.vector_store %arg14[%c0_98, %c0_99], %235 {strides = array<i32>} : memref<16x256xf32, #tpu.memory_space<vmem>>, vector<16x256xf32>,
    %cst_100 = arith.constant 0.000000e+00 : f32
    %237 = vector.broadcast %cst_100 : f32 to vector<2x32xf32>
    %c14_101 = arith.constant 14 : index
    %c128_102 = arith.constant 128 : index
    %238 = vector.load %arg14[%c14_101, %c128_102] : memref<16x256xf32, #tpu.memory_space<vmem>>, vector<2x128xf32>
    %239 = arith.negf %238 : vector<2x128xf32>
    %240 = math.exp %239 : vector<2x128xf32>
    %cst_103 = arith.constant 1.000000e+00 : f32
    %241 = vector.broadcast %cst_103 : f32 to vector<2x128xf32>
    %242 = arith.addf %241, %240 : vector<2x128xf32>
    %243 = arith.divf %241, %242 : vector<2x128xf32>
    %244 = math.tanh %238 : vector<2x128xf32>
    %245 = vector.extract_strided_slice %243 {offsets = [0, 0], sizes = [2, 32], strides = [1, 1]} : vector<2x128xf32> to vector<2x32xf32>
    %246 = vector.extract_strided_slice %243 {offsets = [0, 32], sizes = [2, 32], strides = [1, 1]} : vector<2x128xf32> to vector<2x32xf32>
    %247 = vector.extract_strided_slice %244 {offsets = [0, 64], sizes = [2, 32], strides = [1, 1]} : vector<2x128xf32> to vector<2x32xf32>
    %248 = vector.extract_strided_slice %243 {offsets = [0, 96], sizes = [2, 32], strides = [1, 1]} : vector<2x128xf32> to vector<2x32xf32>
    %249 = arith.mulf %246, %237 : vector<2x32xf32>
    %250 = arith.mulf %245, %247 : vector<2x32xf32>
    %251 = arith.addf %249, %250 : vector<2x32xf32>
    %252 = math.tanh %251 : vector<2x32xf32>
    %253 = arith.mulf %248, %252 : vector<2x32xf32>
    %c0_104 = arith.constant 0 : index
    %c0_105 = arith.constant 0 : index
    %254 = vector.load %arg7[%c0_104, %c0_105] : memref<32x128xf32, #tpu.memory_space<vmem>>, vector<32x128xf32>
    %c0_106 = arith.constant 0 : index
    %c0_107 = arith.constant 0 : index
    %255 = vector.load %arg14[%c0_106, %c0_107] : memref<16x256xf32, #tpu.memory_space<vmem>>, vector<2x128xf32>
    %256 = arith.negf %255 : vector<2x128xf32>
    %257 = math.exp %256 : vector<2x128xf32>
    %cst_108 = arith.constant 1.000000e+00 : f32
    %258 = vector.broadcast %cst_108 : f32 to vector<2x128xf32>
    %259 = arith.addf %258, %257 : vector<2x128xf32>
    %260 = arith.divf %258, %259 : vector<2x128xf32>
    %261 = math.tanh %255 : vector<2x128xf32>
    %262 = vector.extract_strided_slice %260 {offsets = [0, 0], sizes = [2, 32], strides = [1, 1]} : vector<2x128xf32> to vector<2x32xf32>
    %263 = vector.extract_strided_slice %260 {offsets = [0, 32], sizes = [2, 32], strides = [1, 1]} : vector<2x128xf32> to vector<2x32xf32>
    %264 = vector.extract_strided_slice %261 {offsets = [0, 64], sizes = [2, 32], strides = [1, 1]} : vector<2x128xf32> to vector<2x32xf32>
    %265 = vector.extract_strided_slice %260 {offsets = [0, 96], sizes = [2, 32], strides = [1, 1]} : vector<2x128xf32> to vector<2x32xf32>
    %266 = arith.mulf %263, %237 : vector<2x32xf32>
    %267 = arith.mulf %262, %264 : vector<2x32xf32>
    %268 = arith.addf %266, %267 : vector<2x32xf32>
    %269 = math.tanh %268 : vector<2x32xf32>
    %270 = arith.mulf %265, %269 : vector<2x32xf32>
    %c2_109 = arith.constant 2 : index
    %c0_110 = arith.constant 0 : index
    %271 = vector.load %arg14[%c2_109, %c0_110] : memref<16x256xf32, #tpu.memory_space<vmem>>, vector<2x128xf32>
    %cst_111 = arith.constant dense<0.000000e+00> : vector<2x128xf32>
    %272 = tpu.matmul %270, %254, %cst_111 {dimension_numbers = #tpu.dot_dimension_numbers<[1], [0], [0], [1], [0, 0, 1, 1], [], []>} : vector<2x32xf32>, vector<32x128xf32>, vector<2x128xf32> -> vector<2x128xf32>
    %273 = arith.addf %271, %272 : vector<2x128xf32>
    %274 = arith.negf %273 : vector<2x128xf32>
    %275 = math.exp %274 : vector<2x128xf32>
    %cst_112 = arith.constant 1.000000e+00 : f32
    %276 = vector.broadcast %cst_112 : f32 to vector<2x128xf32>
    %277 = arith.addf %276, %275 : vector<2x128xf32>
    %278 = arith.divf %276, %277 : vector<2x128xf32>
    %279 = math.tanh %273 : vector<2x128xf32>
    %280 = vector.extract_strided_slice %278 {offsets = [0, 0], sizes = [2, 32], strides = [1, 1]} : vector<2x128xf32> to vector<2x32xf32>
    %281 = vector.extract_strided_slice %278 {offsets = [0, 32], sizes = [2, 32], strides = [1, 1]} : vector<2x128xf32> to vector<2x32xf32>
    %282 = vector.extract_strided_slice %279 {offsets = [0, 64], sizes = [2, 32], strides = [1, 1]} : vector<2x128xf32> to vector<2x32xf32>
    %283 = vector.extract_strided_slice %278 {offsets = [0, 96], sizes = [2, 32], strides = [1, 1]} : vector<2x128xf32> to vector<2x32xf32>
    %284 = arith.mulf %281, %268 : vector<2x32xf32>
    %285 = arith.mulf %280, %282 : vector<2x32xf32>
    %286 = arith.addf %284, %285 : vector<2x32xf32>
    %287 = math.tanh %286 : vector<2x32xf32>
    %288 = arith.mulf %283, %287 : vector<2x32xf32>
    %c4_113 = arith.constant 4 : index
    %c0_114 = arith.constant 0 : index
    %289 = vector.load %arg14[%c4_113, %c0_114] : memref<16x256xf32, #tpu.memory_space<vmem>>, vector<2x128xf32>
    %cst_115 = arith.constant dense<0.000000e+00> : vector<2x128xf32>
    %290 = tpu.matmul %288, %254, %cst_115 {dimension_numbers = #tpu.dot_dimension_numbers<[1], [0], [0], [1], [0, 0, 1, 1], [], []>} : vector<2x32xf32>, vector<32x128xf32>, vector<2x128xf32> -> vector<2x128xf32>
    %291 = arith.addf %289, %290 : vector<2x128xf32>
    %292 = arith.negf %291 : vector<2x128xf32>
    %293 = math.exp %292 : vector<2x128xf32>
    %cst_116 = arith.constant 1.000000e+00 : f32
    %294 = vector.broadcast %cst_116 : f32 to vector<2x128xf32>
    %295 = arith.addf %294, %293 : vector<2x128xf32>
    %296 = arith.divf %294, %295 : vector<2x128xf32>
    %297 = math.tanh %291 : vector<2x128xf32>
    %298 = vector.extract_strided_slice %296 {offsets = [0, 0], sizes = [2, 32], strides = [1, 1]} : vector<2x128xf32> to vector<2x32xf32>
    %299 = vector.extract_strided_slice %296 {offsets = [0, 32], sizes = [2, 32], strides = [1, 1]} : vector<2x128xf32> to vector<2x32xf32>
    %300 = vector.extract_strided_slice %297 {offsets = [0, 64], sizes = [2, 32], strides = [1, 1]} : vector<2x128xf32> to vector<2x32xf32>
    %301 = vector.extract_strided_slice %296 {offsets = [0, 96], sizes = [2, 32], strides = [1, 1]} : vector<2x128xf32> to vector<2x32xf32>
    %302 = arith.mulf %299, %286 : vector<2x32xf32>
    %303 = arith.mulf %298, %300 : vector<2x32xf32>
    %304 = arith.addf %302, %303 : vector<2x32xf32>
    %305 = math.tanh %304 : vector<2x32xf32>
    %306 = arith.mulf %301, %305 : vector<2x32xf32>
    %c6_117 = arith.constant 6 : index
    %c0_118 = arith.constant 0 : index
    %307 = vector.load %arg14[%c6_117, %c0_118] : memref<16x256xf32, #tpu.memory_space<vmem>>, vector<2x128xf32>
    %cst_119 = arith.constant dense<0.000000e+00> : vector<2x128xf32>
    %308 = tpu.matmul %306, %254, %cst_119 {dimension_numbers = #tpu.dot_dimension_numbers<[1], [0], [0], [1], [0, 0, 1, 1], [], []>} : vector<2x32xf32>, vector<32x128xf32>, vector<2x128xf32> -> vector<2x128xf32>
    %309 = arith.addf %307, %308 : vector<2x128xf32>
    %310 = arith.negf %309 : vector<2x128xf32>
    %311 = math.exp %310 : vector<2x128xf32>
    %cst_120 = arith.constant 1.000000e+00 : f32
    %312 = vector.broadcast %cst_120 : f32 to vector<2x128xf32>
    %313 = arith.addf %312, %311 : vector<2x128xf32>
    %314 = arith.divf %312, %313 : vector<2x128xf32>
    %315 = math.tanh %309 : vector<2x128xf32>
    %316 = vector.extract_strided_slice %314 {offsets = [0, 0], sizes = [2, 32], strides = [1, 1]} : vector<2x128xf32> to vector<2x32xf32>
    %317 = vector.extract_strided_slice %314 {offsets = [0, 32], sizes = [2, 32], strides = [1, 1]} : vector<2x128xf32> to vector<2x32xf32>
    %318 = vector.extract_strided_slice %315 {offsets = [0, 64], sizes = [2, 32], strides = [1, 1]} : vector<2x128xf32> to vector<2x32xf32>
    %319 = vector.extract_strided_slice %314 {offsets = [0, 96], sizes = [2, 32], strides = [1, 1]} : vector<2x128xf32> to vector<2x32xf32>
    %320 = arith.mulf %317, %304 : vector<2x32xf32>
    %321 = arith.mulf %316, %318 : vector<2x32xf32>
    %322 = arith.addf %320, %321 : vector<2x32xf32>
    %323 = math.tanh %322 : vector<2x32xf32>
    %324 = arith.mulf %319, %323 : vector<2x32xf32>
    %c8_121 = arith.constant 8 : index
    %c0_122 = arith.constant 0 : index
    %325 = vector.load %arg14[%c8_121, %c0_122] : memref<16x256xf32, #tpu.memory_space<vmem>>, vector<2x128xf32>
    %cst_123 = arith.constant dense<0.000000e+00> : vector<2x128xf32>
    %326 = tpu.matmul %324, %254, %cst_123 {dimension_numbers = #tpu.dot_dimension_numbers<[1], [0], [0], [1], [0, 0, 1, 1], [], []>} : vector<2x32xf32>, vector<32x128xf32>, vector<2x128xf32> -> vector<2x128xf32>
    %327 = arith.addf %325, %326 : vector<2x128xf32>
    %328 = arith.negf %327 : vector<2x128xf32>
    %329 = math.exp %328 : vector<2x128xf32>
    %cst_124 = arith.constant 1.000000e+00 : f32
    %330 = vector.broadcast %cst_124 : f32 to vector<2x128xf32>
    %331 = arith.addf %330, %329 : vector<2x128xf32>
    %332 = arith.divf %330, %331 : vector<2x128xf32>
    %333 = math.tanh %327 : vector<2x128xf32>
    %334 = vector.extract_strided_slice %332 {offsets = [0, 0], sizes = [2, 32], strides = [1, 1]} : vector<2x128xf32> to vector<2x32xf32>
    %335 = vector.extract_strided_slice %332 {offsets = [0, 32], sizes = [2, 32], strides = [1, 1]} : vector<2x128xf32> to vector<2x32xf32>
    %336 = vector.extract_strided_slice %333 {offsets = [0, 64], sizes = [2, 32], strides = [1, 1]} : vector<2x128xf32> to vector<2x32xf32>
    %337 = vector.extract_strided_slice %332 {offsets = [0, 96], sizes = [2, 32], strides = [1, 1]} : vector<2x128xf32> to vector<2x32xf32>
    %338 = arith.mulf %335, %322 : vector<2x32xf32>
    %339 = arith.mulf %334, %336 : vector<2x32xf32>
    %340 = arith.addf %338, %339 : vector<2x32xf32>
    %341 = math.tanh %340 : vector<2x32xf32>
    %342 = arith.mulf %337, %341 : vector<2x32xf32>
    %c10_125 = arith.constant 10 : index
    %c0_126 = arith.constant 0 : index
    %343 = vector.load %arg14[%c10_125, %c0_126] : memref<16x256xf32, #tpu.memory_space<vmem>>, vector<2x128xf32>
    %cst_127 = arith.constant dense<0.000000e+00> : vector<2x128xf32>
    %344 = tpu.matmul %342, %254, %cst_127 {dimension_numbers = #tpu.dot_dimension_numbers<[1], [0], [0], [1], [0, 0, 1, 1], [], []>} : vector<2x32xf32>, vector<32x128xf32>, vector<2x128xf32> -> vector<2x128xf32>
    %345 = arith.addf %343, %344 : vector<2x128xf32>
    %346 = arith.negf %345 : vector<2x128xf32>
    %347 = math.exp %346 : vector<2x128xf32>
    %cst_128 = arith.constant 1.000000e+00 : f32
    %348 = vector.broadcast %cst_128 : f32 to vector<2x128xf32>
    %349 = arith.addf %348, %347 : vector<2x128xf32>
    %350 = arith.divf %348, %349 : vector<2x128xf32>
    %351 = math.tanh %345 : vector<2x128xf32>
    %352 = vector.extract_strided_slice %350 {offsets = [0, 0], sizes = [2, 32], strides = [1, 1]} : vector<2x128xf32> to vector<2x32xf32>
    %353 = vector.extract_strided_slice %350 {offsets = [0, 32], sizes = [2, 32], strides = [1, 1]} : vector<2x128xf32> to vector<2x32xf32>
    %354 = vector.extract_strided_slice %351 {offsets = [0, 64], sizes = [2, 32], strides = [1, 1]} : vector<2x128xf32> to vector<2x32xf32>
    %355 = vector.extract_strided_slice %350 {offsets = [0, 96], sizes = [2, 32], strides = [1, 1]} : vector<2x128xf32> to vector<2x32xf32>
    %356 = arith.mulf %353, %340 : vector<2x32xf32>
    %357 = arith.mulf %352, %354 : vector<2x32xf32>
    %358 = arith.addf %356, %357 : vector<2x32xf32>
    %359 = math.tanh %358 : vector<2x32xf32>
    %360 = arith.mulf %355, %359 : vector<2x32xf32>
    %c12_129 = arith.constant 12 : index
    %c0_130 = arith.constant 0 : index
    %361 = vector.load %arg14[%c12_129, %c0_130] : memref<16x256xf32, #tpu.memory_space<vmem>>, vector<2x128xf32>
    %cst_131 = arith.constant dense<0.000000e+00> : vector<2x128xf32>
    %362 = tpu.matmul %360, %254, %cst_131 {dimension_numbers = #tpu.dot_dimension_numbers<[1], [0], [0], [1], [0, 0, 1, 1], [], []>} : vector<2x32xf32>, vector<32x128xf32>, vector<2x128xf32> -> vector<2x128xf32>
    %363 = arith.addf %361, %362 : vector<2x128xf32>
    %364 = arith.negf %363 : vector<2x128xf32>
    %365 = math.exp %364 : vector<2x128xf32>
    %cst_132 = arith.constant 1.000000e+00 : f32
    %366 = vector.broadcast %cst_132 : f32 to vector<2x128xf32>
    %367 = arith.addf %366, %365 : vector<2x128xf32>
    %368 = arith.divf %366, %367 : vector<2x128xf32>
    %369 = math.tanh %363 : vector<2x128xf32>
    %370 = vector.extract_strided_slice %368 {offsets = [0, 0], sizes = [2, 32], strides = [1, 1]} : vector<2x128xf32> to vector<2x32xf32>
    %371 = vector.extract_strided_slice %368 {offsets = [0, 32], sizes = [2, 32], strides = [1, 1]} : vector<2x128xf32> to vector<2x32xf32>
    %372 = vector.extract_strided_slice %369 {offsets = [0, 64], sizes = [2, 32], strides = [1, 1]} : vector<2x128xf32> to vector<2x32xf32>
    %373 = vector.extract_strided_slice %368 {offsets = [0, 96], sizes = [2, 32], strides = [1, 1]} : vector<2x128xf32> to vector<2x32xf32>
    %374 = arith.mulf %371, %358 : vector<2x32xf32>
    %375 = arith.mulf %370, %372 : vector<2x32xf32>
    %376 = arith.addf %374, %375 : vector<2x32xf32>
    %377 = math.tanh %376 : vector<2x32xf32>
    %378 = arith.mulf %373, %377 : vector<2x32xf32>
    %c14_133 = arith.constant 14 : index
    %c0_134 = arith.constant 0 : index
    %379 = vector.load %arg14[%c14_133, %c0_134] : memref<16x256xf32, #tpu.memory_space<vmem>>, vector<2x128xf32>
    %cst_135 = arith.constant dense<0.000000e+00> : vector<2x128xf32>
    %380 = tpu.matmul %378, %254, %cst_135 {dimension_numbers = #tpu.dot_dimension_numbers<[1], [0], [0], [1], [0, 0, 1, 1], [], []>} : vector<2x32xf32>, vector<32x128xf32>, vector<2x128xf32> -> vector<2x128xf32>
    %381 = arith.addf %379, %380 : vector<2x128xf32>
    %382 = arith.negf %381 : vector<2x128xf32>
    %383 = math.exp %382 : vector<2x128xf32>
    %cst_136 = arith.constant 1.000000e+00 : f32
    %384 = vector.broadcast %cst_136 : f32 to vector<2x128xf32>
    %385 = arith.addf %384, %383 : vector<2x128xf32>
    %386 = arith.divf %384, %385 : vector<2x128xf32>
    %387 = math.tanh %381 : vector<2x128xf32>
    %388 = vector.extract_strided_slice %386 {offsets = [0, 0], sizes = [2, 32], strides = [1, 1]} : vector<2x128xf32> to vector<2x32xf32>
    %389 = vector.extract_strided_slice %386 {offsets = [0, 32], sizes = [2, 32], strides = [1, 1]} : vector<2x128xf32> to vector<2x32xf32>
    %390 = vector.extract_strided_slice %387 {offsets = [0, 64], sizes = [2, 32], strides = [1, 1]} : vector<2x128xf32> to vector<2x32xf32>
    %391 = vector.extract_strided_slice %386 {offsets = [0, 96], sizes = [2, 32], strides = [1, 1]} : vector<2x128xf32> to vector<2x32xf32>
    %392 = arith.mulf %389, %376 : vector<2x32xf32>
    %393 = arith.mulf %388, %390 : vector<2x32xf32>
    %394 = arith.addf %392, %393 : vector<2x32xf32>
    %395 = math.tanh %394 : vector<2x32xf32>
    %396 = arith.mulf %391, %395 : vector<2x32xf32>
    %c0_137 = arith.constant 0 : index
    %c0_138 = arith.constant 0 : index
    %397 = vector.load %arg8[%c0_137, %c0_138] : memref<64x128xf32, #tpu.memory_space<vmem>>, vector<32x128xf32>
    %cst_139 = arith.constant dense<0.000000e+00> : vector<2x128xf32>
    %398 = tpu.matmul %396, %397, %cst_139 {dimension_numbers = #tpu.dot_dimension_numbers<[1], [0], [0], [1], [0, 0, 1, 1], [], []>} : vector<2x32xf32>, vector<32x128xf32>, vector<2x128xf32> -> vector<2x128xf32>
    %c32 = arith.constant 32 : index
    %c0_140 = arith.constant 0 : index
    %399 = vector.load %arg8[%c32, %c0_140] : memref<64x128xf32, #tpu.memory_space<vmem>>, vector<32x128xf32>
    %cst_141 = arith.constant dense<0.000000e+00> : vector<2x128xf32>
    %400 = tpu.matmul %253, %399, %cst_141 {dimension_numbers = #tpu.dot_dimension_numbers<[1], [0], [0], [1], [0, 0, 1, 1], [], []>} : vector<2x32xf32>, vector<32x128xf32>, vector<2x128xf32> -> vector<2x128xf32>
    %401 = arith.addf %398, %400 : vector<2x128xf32>
    %c0_142 = arith.constant 0 : index
    %c0_143 = arith.constant 0 : index
    %402 = vector.load %arg9[%c0_142, %c0_143] : memref<1x128xf32, #tpu.memory_space<vmem>>, vector<1x128xf32>
    %403 = vector.broadcast %402 : vector<1x128xf32> to vector<2x128xf32>
    %404 = arith.addf %401, %403 : vector<2x128xf32>
    %c0_144 = arith.constant 0 : index
    %c0_145 = arith.constant 0 : index
    %405 = vector.load %arg10[%c0_144, %c0_145] : memref<2x128xf32, #tpu.memory_space<vmem>>, vector<2x128xf32>
    tpu.vector_store %arg10[%c0_144, %c0_145], %404 {strides = array<i32>} : memref<2x128xf32, #tpu.memory_space<vmem>>, vector<2x128xf32>,
    return
  }
  func.func @transform_0(%arg0: i32) -> (i32, i32) {
    %c0_i32 = arith.constant 0 : i32
    %c0_i32_0 = arith.constant 0 : i32
    %c0_i32_1 = arith.constant 0 : i32
    return %c0_i32, %c0_i32_0 : i32, i32
  }
  func.func @transform_1(%arg0: i32) -> (i32, i32) {
    %c0_i32 = arith.constant 0 : i32
    %c0_i32_0 = arith.constant 0 : i32
    %c0_i32_1 = arith.constant 0 : i32
    return %c0_i32, %c0_i32_0 : i32, i32
  }
  func.func @transform_2(%arg0: i32) -> (i32, i32) {
    %c0_i32 = arith.constant 0 : i32
    %c0_i32_0 = arith.constant 0 : i32
    %c0_i32_1 = arith.constant 0 : i32
    return %c0_i32, %c0_i32_0 : i32, i32
  }
  func.func @transform_3(%arg0: i32) -> (i32, i32) {
    %c0_i32 = arith.constant 0 : i32
    %c0_i32_0 = arith.constant 0 : i32
    %c0_i32_1 = arith.constant 0 : i32
    return %c0_i32, %c0_i32_0 : i32, i32
  }
  func.func @transform_4(%arg0: i32) -> (i32, i32) {
    %c0_i32 = arith.constant 0 : i32
    %c0_i32_0 = arith.constant 0 : i32
    %c0_i32_1 = arith.constant 0 : i32
    return %c0_i32, %c0_i32_0 : i32, i32
  }
  func.func @transform_5(%arg0: i32) -> (i32, i32) {
    %c0_i32 = arith.constant 0 : i32
    %c0_i32_0 = arith.constant 0 : i32
    %c0_i32_1 = arith.constant 0 : i32
    return %c0_i32, %c0_i32_0 : i32, i32
  }
  func.func @transform_6(%arg0: i32) -> (i32, i32) {
    %c0_i32 = arith.constant 0 : i32
    %c0_i32_0 = arith.constant 0 : i32
    %c0_i32_1 = arith.constant 0 : i32
    return %c0_i32, %c0_i32_0 : i32, i32
  }
  func.func @transform_7(%arg0: i32) -> (i32, i32) {
    %c0_i32 = arith.constant 0 : i32
    %c0_i32_0 = arith.constant 0 : i32
    %c0_i32_1 = arith.constant 0 : i32
    return %c0_i32, %c0_i32_0 : i32, i32
  }
  func.func @transform_8(%arg0: i32) -> (i32, i32) {
    %c0_i32 = arith.constant 0 : i32
    %c0_i32_0 = arith.constant 0 : i32
    %c0_i32_1 = arith.constant 0 : i32
    return %c0_i32, %c0_i32_0 : i32, i32
  }
  func.func @transform_9(%arg0: i32) -> (i32, i32) {
    %c0_i32 = arith.constant 0 : i32
    %c0_i32_0 = arith.constant 0 : i32
    %c0_i32_1 = arith.constant 0 : i32
    return %c0_i32, %c0_i32_0 : i32, i32
  }
}

</mosaic_0001>

<llo_original>
// kernel: tpu_custom_call.1
$region0: #{tpu_custom_call.1}
  #allocation0 [shape = 'u32[]', space=smem, size = 0x4, offset = 0x4, fixed_abs, tag = 'smem constant byte address 0x4 - core index']
  #allocation1 [shape = 'u32[72,128]{1,0:T(1,128)}', space=vmem, size = 0x9000, scoped, tag = 'internal scratch']
  #allocation2 [shape = 'f32[16,256]{1,0:T(8,128)}', space=vmem, size = 0x4000, scoped, tag = 'scratch operand']
  #allocation3 [shape = 'f32[16,32]{1,0:T(8,128)}', space=vmem, size = 0x2000, scoped, tag = 'scratch operand']
  #allocation4 [shape = 'f32[16,32]{1,0:T(8,128)}', space=vmem, size = 0x2000, scoped, tag = 'scratch operand']
  #allocation5 [shape = 'f32[16,256]{1,0:T(8,128)}', space=vmem, size = 0x4000, scoped, tag = 'scratch operand']
  %s0 = inlined_call_operand.hbm [shape: f32[16,16], index: 0, kind: input, shape index: {}]
  %s1 = inlined_call_operand.hbm [shape: f32[16,256], index: 1, kind: input, shape index: {}]
  %s2 = inlined_call_operand.hbm [shape: f32[1,256], index: 2, kind: input, shape index: {}]
  %s3 = inlined_call_operand.hbm [shape: f32[64,128], index: 3, kind: input, shape index: {}]
  %s4 = inlined_call_operand.hbm [shape: f32[64,256], index: 4, kind: input, shape index: {}]
  %s5 = inlined_call_operand.vmem [shape: f32[1,256], index: 5, kind: input, shape index: {}]
  %s6 = inlined_call_operand.hbm [shape: f32[32,128], index: 6, kind: input, shape index: {}]
  %s7 = inlined_call_operand.hbm [shape: f32[64,128], index: 7, kind: input, shape index: {}]
  %s8 = inlined_call_operand.vmem [shape: f32[1,128], index: 8, kind: input, shape index: {}]
  %s9 = inlined_call_operand.hbm [shape: f32[2,128], index: 9, kind: output, shape index: {}]
  %s10 = sld [smem:[#allocation0]]
  $region74: #{tpu_custom_call.1} parent=0
    _
  %s12 = ssub.s32 1, %s10
  %s13 = scalar_select 0, %s12, %s10
  $region1: #{tpu_custom_call.1} parent=0
    #allocation6 [shape = 'u8[8192]{0}', space=vmem, size = 0x2000, scoped, tag = 'input window, operand 0, single buffered']
    #allocation7 [shape = 's32[1]{0}', space=sflag, size = 0x4, scoped, tag = 'scoped memory for tpu_custom_call.1']
    #allocation8 [shape = 's32[1]{0}', space=sflag, size = 0x4, scoped, tag = 'scoped memory for tpu_custom_call.1']
    #allocation9 [shape = 'u8[16384]{0}', space=vmem, size = 0x4000, scoped, tag = 'input window, operand 1, single buffered']
    #allocation10 [shape = 's32[1]{0}', space=sflag, size = 0x4, scoped, tag = 'scoped memory for tpu_custom_call.1']
    #allocation11 [shape = 'u8[1024]{0}', space=vmem, size = 0x400, scoped, tag = 'input window, operand 2, single buffered']
    #allocation12 [shape = 'u8[32768]{0}', space=vmem, size = 0x8000, scoped, tag = 'input window, operand 3, single buffered']
    #allocation13 [shape = 's32[1]{0}', space=sflag, size = 0x4, scoped, tag = 'scoped memory for tpu_custom_call.1']
    #allocation14 [shape = 'u8[65536]{0}', space=vmem, size = 0x10000, scoped, tag = 'input window, operand 4, single buffered']
    #allocation15 [shape = 'u8[16384]{0}', space=vmem, size = 0x4000, scoped, tag = 'input window, operand 6, single buffered']
    #allocation16 [shape = 's32[1]{0}', space=sflag, size = 0x4, scoped, tag = 'scoped memory for tpu_custom_call.1']
    #allocation17 [shape = 'u8[32768]{0}', space=vmem, size = 0x8000, scoped, tag = 'input window, operand 7, single buffered']
    #allocation18 [shape = 'u8[1024]{0}', space=vmem, size = 0x400, scoped, tag = 'output window, operand 0, single buffered']
    %14 = vsyncpa [#allocation7], 0
    %15 = vsyncpa [#allocation10], 0
    %16 = vsyncpa [#allocation13], 0
    %17 = vsyncpa [#allocation16], 0
    %18 = vsyncpa [#allocation8], 0
    // Predicated region
    $region2: #{tpu_custom_call.1} parent=1 // pred_check
      _
    $region3: #{tpu_custom_call.1} parent=1 // pred_check_branch
      %20 = sbr.rel (0) target = $region5
    $region4: #{tpu_custom_call.1} parent=1 // pred_region
      %22 = vsyncadd [#allocation7], 0
      %s23 = sshll.u32 %s0, 4
      %s24 = int_to_ptr.hbm [resolvable:$true] %s23
      %s25 = sshll.u32 [#allocation6], 4
      %s26 = int_to_ptr.vmem [resolvable:$true] %s25
      %31 = dma.hbm_to_vmem [thread:$0]  %s24, 256, %s26, [#allocation7], 128, 128, 8
    $region5: #{tpu_custom_call.1} parent=1 // pred_fallthru
      _
    // Predicated region
    $region6: #{tpu_custom_call.1} parent=1 // pred_check
      _
    $region7: #{tpu_custom_call.1} parent=1 // pred_check_branch
      %33 = sbr.rel (0) target = $region9
    $region8: #{tpu_custom_call.1} parent=1 // pred_region
      %35 = vsyncadd [#allocation10], 0
      %s36 = sshll.u32 %s1, 4
      %s37 = int_to_ptr.hbm [resolvable:$true] %s36
      %s38 = sshll.u32 [#allocation9], 4
      %s39 = int_to_ptr.vmem [resolvable:$true] %s38
      %44 = dma.hbm_to_vmem [thread:$0]  %s37, 512, %s39, [#allocation10], 256, 256, 16
    $region9: #{tpu_custom_call.1} parent=1 // pred_fallthru
      _
    // Predicated region
    $region10: #{tpu_custom_call.1} parent=1 // pred_check
      _
    $region11: #{tpu_custom_call.1} parent=1 // pred_check_branch
      %46 = sbr.rel (0) target = $region13
    $region12: #{tpu_custom_call.1} parent=1 // pred_region
      %48 = vsyncadd [#allocation10], 0
      %s50 = sshll.u32 %s2, 4
      %s51 = int_to_ptr.hbm [resolvable:$true] %s50
      %s52 = sshll.u32 [#allocation11], 4
      %s53 = int_to_ptr.vmem [resolvable:$true] %s52
      %55 = dma.hbm_to_vmem [thread:$0]  %s51, 32, %s53, [#allocation10]
    $region13: #{tpu_custom_call.1} parent=1 // pred_fallthru
      _
    // Predicated region
    $region14: #{tpu_custom_call.1} parent=1 // pred_check
      _
    $region15: #{tpu_custom_call.1} parent=1 // pred_check_branch
      %57 = sbr.rel (0) target = $region17
    $region16: #{tpu_custom_call.1} parent=1 // pred_region
      %59 = vsyncadd [#allocation13], 0
      %s60 = sshll.u32 %s3, 4
      %s61 = int_to_ptr.hbm [resolvable:$true] %s60
      %s62 = sshll.u32 [#allocation12], 4
      %s63 = int_to_ptr.vmem [resolvable:$true] %s62
      %68 = dma.hbm_to_vmem [thread:$0]  %s61, 1024, %s63, [#allocation13], 128, 128, 8
    $region17: #{tpu_custom_call.1} parent=1 // pred_fallthru
      _
    // Predicated region
    $region18: #{tpu_custom_call.1} parent=1 // pred_check
      _
    $region19: #{tpu_custom_call.1} parent=1 // pred_check_branch
      %70 = sbr.rel (0) target = $region21
    $region20: #{tpu_custom_call.1} parent=1 // pred_region
      %72 = vsyncadd [#allocation13], 0
      %s73 = sshll.u32 %s4, 4
      %s74 = int_to_ptr.hbm [resolvable:$true] %s73
      %s75 = sshll.u32 [#allocation14], 4
      %s76 = int_to_ptr.vmem [resolvable:$true] %s75
      %81 = dma.hbm_to_vmem [thread:$0]  %s74, 2048, %s76, [#allocation13], 256, 256, 16
    $region21: #{tpu_custom_call.1} parent=1 // pred_fallthru
      _
    // Predicated region
    $region22: #{tpu_custom_call.1} parent=1 // pred_check
      _
    $region23: #{tpu_custom_call.1} parent=1 // pred_check_branch
      %83 = sbr.rel (0) target = $region25
    $region24: #{tpu_custom_call.1} parent=1 // pred_region
      _
    $region25: #{tpu_custom_call.1} parent=1 // pred_fallthru
      _
    // Predicated region
    $region26: #{tpu_custom_call.1} parent=1 // pred_check
      _
    $region27: #{tpu_custom_call.1} parent=1 // pred_check_branch
      %85 = sbr.rel (0) target = $region29
    $region28: #{tpu_custom_call.1} parent=1 // pred_region
      %87 = vsyncadd [#allocation16], 0
      %s88 = sshll.u32 %s6, 4
      %s89 = int_to_ptr.hbm [resolvable:$true] %s88
      %s90 = sshll.u32 [#allocation15], 4
      %s91 = int_to_ptr.vmem [resolvable:$true] %s90
      %96 = dma.hbm_to_vmem [thread:$0]  %s89, 512, %s91, [#allocation16], 128, 128, 8
    $region29: #{tpu_custom_call.1} parent=1 // pred_fallthru
      _
    // Predicated region
    $region30: #{tpu_custom_call.1} parent=1 // pred_check
      _
    $region31: #{tpu_custom_call.1} parent=1 // pred_check_branch
      %98 = sbr.rel (0) target = $region33
    $region32: #{tpu_custom_call.1} parent=1 // pred_region
      %100 = vsyncadd [#allocation16], 0
      %s101 = sshll.u32 %s7, 4
      %s102 = int_to_ptr.hbm [resolvable:$true] %s101
      %s103 = sshll.u32 [#allocation17], 4
      %s104 = int_to_ptr.vmem [resolvable:$true] %s103
      %109 = dma.hbm_to_vmem [thread:$0]  %s102, 1024, %s104, [#allocation16], 128, 128, 8
    $region33: #{tpu_custom_call.1} parent=1 // pred_fallthru
      _
    // Predicated region
    $region34: #{tpu_custom_call.1} parent=1 // pred_check
      _
    $region35: #{tpu_custom_call.1} parent=1 // pred_check_branch
      %111 = sbr.rel (0) target = $region37
    $region36: #{tpu_custom_call.1} parent=1 // pred_region
      _
    $region37: #{tpu_custom_call.1} parent=1 // pred_fallthru
      _
    // Predicated region
    $region38: #{tpu_custom_call.1} parent=1 // pred_check
      _
    $region39: #{tpu_custom_call.1} parent=1 // pred_check_branch
      %113 = sbr.rel (0) target = $region41
    $region40: #{tpu_custom_call.1} parent=1 // pred_region
      %115 = dma.done [#allocation7], 256
    $region41: #{tpu_custom_call.1} parent=1 // pred_fallthru
      _
    // Predicated region
    $region42: #{tpu_custom_call.1} parent=1 // pred_check
      _
    $region43: #{tpu_custom_call.1} parent=1 // pred_check_branch
      %117 = sbr.rel (0) target = $region45
    $region44: #{tpu_custom_call.1} parent=1 // pred_region
      %119 = dma.done [#allocation10], 512
    $region45: #{tpu_custom_call.1} parent=1 // pred_fallthru
      _
    // Predicated region
    $region46: #{tpu_custom_call.1} parent=1 // pred_check
      _
    $region47: #{tpu_custom_call.1} parent=1 // pred_check_branch
      %121 = sbr.rel (0) target = $region49
    $region48: #{tpu_custom_call.1} parent=1 // pred_region
      %123 = dma.done [#allocation10], 32
    $region49: #{tpu_custom_call.1} parent=1 // pred_fallthru
      _
    // Predicated region
    $region50: #{tpu_custom_call.1} parent=1 // pred_check
      _
    $region51: #{tpu_custom_call.1} parent=1 // pred_check_branch
      %125 = sbr.rel (0) target = $region53
    $region52: #{tpu_custom_call.1} parent=1 // pred_region
      %127 = dma.done [#allocation13], 1024
    $region53: #{tpu_custom_call.1} parent=1 // pred_fallthru
      _
    // Predicated region
    $region54: #{tpu_custom_call.1} parent=1 // pred_check
      _
    $region55: #{tpu_custom_call.1} parent=1 // pred_check_branch
      %129 = sbr.rel (0) target = $region57
    $region56: #{tpu_custom_call.1} parent=1 // pred_region
      %131 = dma.done [#allocation13], 2048
    $region57: #{tpu_custom_call.1} parent=1 // pred_fallthru
      _
    // Predicated region
    $region58: #{tpu_custom_call.1} parent=1 // pred_check
      _
    $region59: #{tpu_custom_call.1} parent=1 // pred_check_branch
      %133 = sbr.rel (0) target = $region61
    $region60: #{tpu_custom_call.1} parent=1 // pred_region
      %135 = dma.done [#allocation16], 512
    $region61: #{tpu_custom_call.1} parent=1 // pred_fallthru
      _
    // Predicated region
    $region62: #{tpu_custom_call.1} parent=1 // pred_check
      _
    $region63: #{tpu_custom_call.1} parent=1 // pred_check_branch
      %137 = sbr.rel (0) target = $region65
    $region64: #{tpu_custom_call.1} parent=1 // pred_region
      %139 = dma.done [#allocation16], 1024
    $region65: #{tpu_custom_call.1} parent=1 // pred_fallthru
      _
    %v140 = vld [vmem:[#allocation6] sm:$0xff]
    %v141 = vld [vmem:[#allocation6 + $0x8] sm:$0xff]
    %v142 = vld [vmem:[#allocation9] sm:$0xff]
    %v143 = vld [vmem:[#allocation9 + $0x8] sm:$0xff]
    %v144 = vld [vmem:[#allocation9 + $0x10] sm:$0xff]
    %v145 = vld [vmem:[#allocation9 + $0x18] sm:$0xff]
    %v146 = vld [vmem:[#allocation11] sm:$0x3]
    %v148 = vperm.slane %v146, 0
    %v149 = vperm.slane %v146, 1
    %vm152 = vcmask 130048
    %v154 = vsel %vm152, %v140, 0
    %v157 = vsel %vm152, %v141, 0
    %159 = vmatpush.msra.mxu0 0.0
    %160 = vmatpush.msra.mxu0 0.0
    %161 = vmatpush.msra.mxu0 0.0
    %162 = vmatpush.msra.mxu0 0.0
    %163 = vmatpush.msra.mxu0 0.0
    %164 = vmatpush.msra.mxu0 0.0
    %165 = vmatpush.msra.mxu0 0.0
    %166 = vmatpush.msra.mxu0 0.0
    %167 = vmatpush.msra.mxu0 0.0
    %168 = vmatpush.msra.mxu0 0.0
    %169 = vmatpush.msra.mxu0 0.0
    %170 = vmatpush.msra.mxu0 0.0
    %171 = vmatpush.msra.mxu0 0.0
    %172 = vmatpush.msra.mxu0 0.0
    %173 = vmatpush.msra.mxu0 %v144
    %174 = vmatpush.msra.mxu0 %v142
    %175 = vmatmul.f32.gmra.mxu0 %v154
    %v176 = vpop.f32.mrf.mxu0
    %v177 = vadd.f32 %v148, %v176
    %178 = vmatmul.f32.gmra.mxu0 %v157
    %v179 = vpop.f32.mrf.mxu0
    %v180 = vadd.f32 %v148, %v179
    %181 = vdwg.mxu0
    %182 = vmatpush.msra.mxu0 0.0
    %183 = vmatpush.msra.mxu0 0.0
    %184 = vmatpush.msra.mxu0 0.0
    %185 = vmatpush.msra.mxu0 0.0
    %186 = vmatpush.msra.mxu0 0.0
    %187 = vmatpush.msra.mxu0 0.0
    %188 = vmatpush.msra.mxu0 0.0
    %189 = vmatpush.msra.mxu0 0.0
    %190 = vmatpush.msra.mxu0 0.0
    %191 = vmatpush.msra.mxu0 0.0
    %192 = vmatpush.msra.mxu0 0.0
    %193 = vmatpush.msra.mxu0 0.0
    %194 = vmatpush.msra.mxu0 0.0
    %195 = vmatpush.msra.mxu0 0.0
    %196 = vmatpush.msra.mxu0 %v145
    %197 = vmatpush.msra.mxu0 %v143
    %198 = vmatmul.f32.gmra.mxu0 %v154
    %v199 = vpop.f32.mrf.mxu0
    %v200 = vadd.f32 %v149, %v199
    %201 = vmatmul.f32.gmra.mxu0 %v157
    %v202 = vpop.f32.mrf.mxu0
    %v203 = vadd.f32 %v149, %v202
    %204 = vdwg.mxu0
    %205 = vst [vmem:[#allocation2] sm:$0xff] %v177
    %206 = vst [vmem:[#allocation2 + $0x8] sm:$0xff] %v200
    %207 = vst [vmem:[#allocation2 + $0x10] sm:$0xff] %v180
    %208 = vst [vmem:[#allocation2 + $0x18] sm:$0xff] %v203
    %v209 = vld [vmem:[#allocation12] sm:$0xff]
    %v210 = vld [vmem:[#allocation12 + $0x8] sm:$0xff]
    %v211 = vld [vmem:[#allocation12 + $0x10] sm:$0xff]
    %v212 = vld [vmem:[#allocation12 + $0x18] sm:$0xff]
    %v213 = vld [vmem:[#allocation12 + $0x20] sm:$0xff]
    %v214 = vld [vmem:[#allocation12 + $0x28] sm:$0xff]
    %v215 = vld [vmem:[#allocation12 + $0x30] sm:$0xff]
    %v216 = vld [vmem:[#allocation12 + $0x38] sm:$0xff]
    %v217 = vlaneseq
    %v218 = vshrl.u32 %v217, 7
    %v219 = vlaneseq
    %v220 = vand.u32 %v219, 127
    %vm221 = vcmp.lt.s32.totalorder %v218, 2
    %vm222 = vcmp.lt.s32.totalorder %v220, 32
    %vm223 = vmxor %vm221, %vm222
    %vm224 = vmxor %vm223, 1
    %v225 = vld [vmem:[#allocation2] sm:$0x3]
    %v226 = vld [vmem:[#allocation2 + $0x18] sm:$0xc0]
    %v228 = vrot.slane %v226, 4
    %vm230 = vcmask 1041408
    %v231 = vsel %vm230, %v225, %v228
    %v232 = vxor.u32 %v231, 2147483648
    %v233 = vmul.f32 %v232, 1.442695
    %v234 = vpow.pop %v233
    %v235 = vadd.f32 %v234, 1.0
    %v236 = vrcp.pop %v235
    %v237 = vmul.f32 %v235, %v236
    %v238 = vsub.f32 1.0, %v237
    %v239 = vmul.f32 %v236, %v238
    %v240 = vadd.f32 %v236, %v239
    %vm241 = vweird.f32 %v235
    %vm242 = vweird.f32 %v236
    %vm243 = vmor %vm241, %vm242
    %v244 = vsel %vm243, %v236, %v240
    %v245 = vand.u32 2147483647, %v235
    %vm246 = vcmp.eq.f32.partialorder %v245, 8.507059e+37
    %v247 = vand.u32 %v235, 2147483648
    %v248 = vor.u32 1.1754944e-38, %v247
    %v249 = vsel %vm246, %v248, %v244
    %v250 = vmul.f32 1.0, %v249
    %v251 = vtanh.pop %v231
    %v252 = vmul.f32 %v250, 0.0
    %254 = vrot.lane.b32.xlu0 %v251, 64
    %v255 = vpop.permute.xlu0 %254
    %v257 = vmul.f32 %v250, %v255
    %259 = vrot.lane.b32.xlu0 %v257, 32
    %v260 = vpop.permute.xlu0 %259
    %v262 = vadd.f32 %v252, %v260
    %v263 = vtanh.pop %v262
    %265 = vrot.lane.b32.xlu0 %v263, 64
    %v266 = vpop.permute.xlu0 %265
    %v268 = vmul.f32 %v250, %v266
    %270 = vrot.lane.b32.xlu0 %v268, 32
    %v271 = vpop.permute.xlu0 %270
    %vm273 = vcmask 254976
    %274 = vst.msk [vmem:[#allocation3] sm:$0x3] %vm273, %v271
    %vm275 = vcmask 257026
    %276 = vst.msk [vmem:[#allocation4 + $0xc] sm:$0xc] %vm275, %v271
    %v277 = vld [vmem:[#allocation2] sm:$0xc]
    %v278 = vld [vmem:[#allocation2 + $0x18] sm:$0x30]
    %v280 = vrot.slane %v277, 2
    %v283 = vrot.slane %v278, 2
    %v285 = vsel %vm230, %v280, %v283
    %286 = vrot.lane.b32.xlu0 %v268, 64
    %v287 = vpop.permute.xlu0 %286
    %vm289 = vcmask 261120
    %v290 = vsel %vm289, %v271, %v287
    %v291 = vsel %vm224, %v290, 0.0
    %vm292 = vcmask 523264
    %v294 = vsel %vm292, %v291, 0
    %296 = vmatpush.msra.mxu0 0.0
    %297 = vmatpush.msra.mxu0 0.0
    %298 = vmatpush.msra.mxu0 0.0
    %299 = vmatpush.msra.mxu0 0.0
    %300 = vmatpush.msra.mxu0 0.0
    %301 = vmatpush.msra.mxu0 0.0
    %302 = vmatpush.msra.mxu0 0.0
    %303 = vmatpush.msra.mxu0 0.0
    %304 = vmatpush.msra.mxu0 %v216
    %305 = vmatpush.msra.mxu0 %v215
    %306 = vmatpush.msra.mxu0 %v214
    %307 = vmatpush.msra.mxu0 %v213
    %308 = vmatpush.msra.mxu0 %v212
    %309 = vmatpush.msra.mxu0 %v211
    %310 = vmatpush.msra.mxu0 %v210
    %311 = vmatpush.msra.mxu0 %v209
    %312 = vmatmul.f32.gmra.mxu0 %v294
    %v313 = vpop.f32.mrf.mxu0
    %v314 = vadd.f32 0.0, %v313
    %315 = vdwg.mxu0
    %v316 = vadd.f32 %v285, %v314
    %v317 = vxor.u32 %v316, 2147483648
    %v318 = vmul.f32 %v317, 1.442695
    %v319 = vpow.pop %v318
    %v320 = vadd.f32 %v319, 1.0
    %v321 = vrcp.pop %v320
    %v322 = vmul.f32 %v320, %v321
    %v323 = vsub.f32 1.0, %v322
    %v324 = vmul.f32 %v321, %v323
    %v325 = vadd.f32 %v321, %v324
    %vm326 = vweird.f32 %v320
    %vm327 = vweird.f32 %v321
    %vm328 = vmor %vm326, %vm327
    %v329 = vsel %vm328, %v321, %v325
    %v330 = vand.u32 2147483647, %v320
    %vm331 = vcmp.eq.f32.partialorder %v330, 8.507059e+37
    %v332 = vand.u32 %v320, 2147483648
    %v333 = vor.u32 1.1754944e-38, %v332
    %v334 = vsel %vm331, %v333, %v329
    %v335 = vmul.f32 1.0, %v334
    %v336 = vtanh.pop %v316
    %v337 = vmul.f32 %v335, %v262
    %339 = vrot.lane.b32.xlu0 %v336, 64
    %v340 = vpop.permute.xlu0 %339
    %v342 = vmul.f32 %v335, %v340
    %344 = vrot.lane.b32.xlu0 %v342, 32
    %v345 = vpop.permute.xlu0 %344
    %v347 = vadd.f32 %v337, %v345
    %v348 = vtanh.pop %v347
    %350 = vrot.lane.b32.xlu0 %v348, 64
    %v351 = vpop.permute.xlu0 %350
    %v353 = vmul.f32 %v335, %v351
    %355 = vrot.lane.b32.xlu0 %v353, 32
    %v356 = vpop.permute.xlu0 %355
    %358 = vst.msk [vmem:[#allocation3 + $0x2] sm:$0x3] %vm273, %v356
    %359 = vst.msk [vmem:[#allocation4 + $0xa] sm:$0xc] %vm275, %v356
    %v360 = vld [vmem:[#allocation2] sm:$0x30]
    %v361 = vld [vmem:[#allocation2 + $0x18] sm:$0xc]
    %v363 = vrot.slane %v360, 4
    %v365 = vsel %vm230, %v363, %v361
    %366 = vrot.lane.b32.xlu0 %v353, 64
    %v367 = vpop.permute.xlu0 %366
    %v369 = vsel %vm289, %v356, %v367
    %v370 = vsel %vm224, %v369, 0.0
    %v372 = vsel %vm292, %v370, 0
    %374 = vmatpush.msra.mxu0 0.0
    %375 = vmatpush.msra.mxu0 0.0
    %376 = vmatpush.msra.mxu0 0.0
    %377 = vmatpush.msra.mxu0 0.0
    %378 = vmatpush.msra.mxu0 0.0
    %379 = vmatpush.msra.mxu0 0.0
    %380 = vmatpush.msra.mxu0 0.0
    %381 = vmatpush.msra.mxu0 0.0
    %382 = vmatpush.msra.mxu0 %v216
    %383 = vmatpush.msra.mxu0 %v215
    %384 = vmatpush.msra.mxu0 %v214
    %385 = vmatpush.msra.mxu0 %v213
    %386 = vmatpush.msra.mxu0 %v212
    %387 = vmatpush.msra.mxu0 %v211
    %388 = vmatpush.msra.mxu0 %v210
    %389 = vmatpush.msra.mxu0 %v209
    %390 = vmatmul.f32.gmra.mxu0 %v372
    %v391 = vpop.f32.mrf.mxu0
    %v392 = vadd.f32 0.0, %v391
    %393 = vdwg.mxu0
    %v394 = vadd.f32 %v365, %v392
    %v395 = vxor.u32 %v394, 2147483648
    %v396 = vmul.f32 %v395, 1.442695
    %v397 = vpow.pop %v396
    %v398 = vadd.f32 %v397, 1.0
    %v399 = vrcp.pop %v398
    %v400 = vmul.f32 %v398, %v399
    %v401 = vsub.f32 1.0, %v400
    %v402 = vmul.f32 %v399, %v401
    %v403 = vadd.f32 %v399, %v402
    %vm404 = vweird.f32 %v398
    %vm405 = vweird.f32 %v399
    %vm406 = vmor %vm404, %vm405
    %v407 = vsel %vm406, %v399, %v403
    %v408 = vand.u32 2147483647, %v398
    %vm409 = vcmp.eq.f32.partialorder %v408, 8.507059e+37
    %v410 = vand.u32 %v398, 2147483648
    %v411 = vor.u32 1.1754944e-38, %v410
    %v412 = vsel %vm409, %v411, %v407
    %v413 = vmul.f32 1.0, %v412
    %v414 = vtanh.pop %v394
    %v415 = vmul.f32 %v413, %v347
    %417 = vrot.lane.b32.xlu0 %v414, 64
    %v418 = vpop.permute.xlu0 %417
    %v420 = vmul.f32 %v413, %v418
    %422 = vrot.lane.b32.xlu0 %v420, 32
    %v423 = vpop.permute.xlu0 %422
    %v425 = vadd.f32 %v415, %v423
    %v426 = vtanh.pop %v425
    %428 = vrot.lane.b32.xlu0 %v426, 64
    %v429 = vpop.permute.xlu0 %428
    %v431 = vmul.f32 %v413, %v429
    %433 = vrot.lane.b32.xlu0 %v431, 32
    %v434 = vpop.permute.xlu0 %433
    %436 = vst.msk [vmem:[#allocation3 + $0x4] sm:$0x3] %vm273, %v434
    %437 = vst.msk [vmem:[#allocation4 + $0x8] sm:$0xc] %vm275, %v434
    %v438 = vld [vmem:[#allocation2] sm:$0xc0]
    %v439 = vld [vmem:[#allocation2 + $0x18] sm:$0x3]
    %v441 = vrot.slane %v438, 6
    %v444 = vrot.slane %v439, 6
    %v446 = vsel %vm230, %v441, %v444
    %447 = vrot.lane.b32.xlu0 %v431, 64
    %v448 = vpop.permute.xlu0 %447
    %v450 = vsel %vm289, %v434, %v448
    %v451 = vsel %vm224, %v450, 0.0
    %v453 = vsel %vm292, %v451, 0
    %455 = vmatpush.msra.mxu0 0.0
    %456 = vmatpush.msra.mxu0 0.0
    %457 = vmatpush.msra.mxu0 0.0
    %458 = vmatpush.msra.mxu0 0.0
    %459 = vmatpush.msra.mxu0 0.0
    %460 = vmatpush.msra.mxu0 0.0
    %461 = vmatpush.msra.mxu0 0.0
    %462 = vmatpush.msra.mxu0 0.0
    %463 = vmatpush.msra.mxu0 %v216
    %464 = vmatpush.msra.mxu0 %v215
    %465 = vmatpush.msra.mxu0 %v214
    %466 = vmatpush.msra.mxu0 %v213
    %467 = vmatpush.msra.mxu0 %v212
    %468 = vmatpush.msra.mxu0 %v211
    %469 = vmatpush.msra.mxu0 %v210
    %470 = vmatpush.msra.mxu0 %v209
    %471 = vmatmul.f32.gmra.mxu0 %v453
    %v472 = vpop.f32.mrf.mxu0
    %v473 = vadd.f32 0.0, %v472
    %474 = vdwg.mxu0
    %v475 = vadd.f32 %v446, %v473
    %v476 = vxor.u32 %v475, 2147483648
    %v477 = vmul.f32 %v476, 1.442695
    %v478 = vpow.pop %v477
    %v479 = vadd.f32 %v478, 1.0
    %v480 = vrcp.pop %v479
    %v481 = vmul.f32 %v479, %v480
    %v482 = vsub.f32 1.0, %v481
    %v483 = vmul.f32 %v480, %v482
    %v484 = vadd.f32 %v480, %v483
    %vm485 = vweird.f32 %v479
    %vm486 = vweird.f32 %v480
    %vm487 = vmor %vm485, %vm486
    %v488 = vsel %vm487, %v480, %v484
    %v489 = vand.u32 2147483647, %v479
    %vm490 = vcmp.eq.f32.partialorder %v489, 8.507059e+37
    %v491 = vand.u32 %v479, 2147483648
    %v492 = vor.u32 1.1754944e-38, %v491
    %v493 = vsel %vm490, %v492, %v488
    %v494 = vmul.f32 1.0, %v493
    %v495 = vtanh.pop %v475
    %v496 = vmul.f32 %v494, %v425
    %498 = vrot.lane.b32.xlu0 %v495, 64
    %v499 = vpop.permute.xlu0 %498
    %v501 = vmul.f32 %v494, %v499
    %503 = vrot.lane.b32.xlu0 %v501, 32
    %v504 = vpop.permute.xlu0 %503
    %v506 = vadd.f32 %v496, %v504
    %v507 = vtanh.pop %v506
    %509 = vrot.lane.b32.xlu0 %v507, 64
    %v510 = vpop.permute.xlu0 %509
    %v512 = vmul.f32 %v494, %v510
    %514 = vrot.lane.b32.xlu0 %v512, 32
    %v515 = vpop.permute.xlu0 %514
    %517 = vst.msk [vmem:[#allocation3 + $0x6] sm:$0x3] %vm273, %v515
    %518 = vst.msk [vmem:[#allocation4 + $0x6] sm:$0xc] %vm275, %v515
    %v519 = vld [vmem:[#allocation2 + $0x10] sm:$0x3]
    %v520 = vld [vmem:[#allocation2 + $0x8] sm:$0xc0]
    %v522 = vrot.slane %v520, 4
    %v524 = vsel %vm230, %v519, %v522
    %525 = vrot.lane.b32.xlu0 %v512, 64
    %v526 = vpop.permute.xlu0 %525
    %v528 = vsel %vm289, %v515, %v526
    %v529 = vsel %vm224, %v528, 0.0
    %v531 = vsel %vm292, %v529, 0
    %533 = vmatpush.msra.mxu0 0.0
    %534 = vmatpush.msra.mxu0 0.0
    %535 = vmatpush.msra.mxu0 0.0
    %536 = vmatpush.msra.mxu0 0.0
    %537 = vmatpush.msra.mxu0 0.0
    %538 = vmatpush.msra.mxu0 0.0
    %539 = vmatpush.msra.mxu0 0.0
    %540 = vmatpush.msra.mxu0 0.0
    %541 = vmatpush.msra.mxu0 %v216
    %542 = vmatpush.msra.mxu0 %v215
    %543 = vmatpush.msra.mxu0 %v214
    %544 = vmatpush.msra.mxu0 %v213
    %545 = vmatpush.msra.mxu0 %v212
    %546 = vmatpush.msra.mxu0 %v211
    %547 = vmatpush.msra.mxu0 %v210
    %548 = vmatpush.msra.mxu0 %v209
    %549 = vmatmul.f32.gmra.mxu0 %v531
    %v550 = vpop.f32.mrf.mxu0
    %v551 = vadd.f32 0.0, %v550
    %552 = vdwg.mxu0
    %v553 = vadd.f32 %v524, %v551
    %v554 = vxor.u32 %v553, 2147483648
    %v555 = vmul.f32 %v554, 1.442695
    %v556 = vpow.pop %v555
    %v557 = vadd.f32 %v556, 1.0
    %v558 = vrcp.pop %v557
    %v559 = vmul.f32 %v557, %v558
    %v560 = vsub.f32 1.0, %v559
    %v561 = vmul.f32 %v558, %v560
    %v562 = vadd.f32 %v558, %v561
    %vm563 = vweird.f32 %v557
    %vm564 = vweird.f32 %v558
    %vm565 = vmor %vm563, %vm564
    %v566 = vsel %vm565, %v558, %v562
    %v567 = vand.u32 2147483647, %v557
    %vm568 = vcmp.eq.f32.partialorder %v567, 8.507059e+37
    %v569 = vand.u32 %v557, 2147483648
    %v570 = vor.u32 1.1754944e-38, %v569
    %v571 = vsel %vm568, %v570, %v566
    %v572 = vmul.f32 1.0, %v571
    %v573 = vtanh.pop %v553
    %v574 = vmul.f32 %v572, %v506
    %576 = vrot.lane.b32.xlu0 %v573, 64
    %v577 = vpop.permute.xlu0 %576
    %v579 = vmul.f32 %v572, %v577
    %581 = vrot.lane.b32.xlu0 %v579, 32
    %v582 = vpop.permute.xlu0 %581
    %v584 = vadd.f32 %v574, %v582
    %v585 = vtanh.pop %v584
    %587 = vrot.lane.b32.xlu0 %v585, 64
    %v588 = vpop.permute.xlu0 %587
    %v590 = vmul.f32 %v572, %v588
    %592 = vrot.lane.b32.xlu0 %v590, 32
    %v593 = vpop.permute.xlu0 %592
    %595 = vst.msk [vmem:[#allocation3 + $0x8] sm:$0x3] %vm273, %v593
    %596 = vst.msk [vmem:[#allocation4 + $0x4] sm:$0xc] %vm275, %v593
    %v597 = vld [vmem:[#allocation2 + $0x10] sm:$0xc]
    %v598 = vld [vmem:[#allocation2 + $0x8] sm:$0x30]
    %v600 = vrot.slane %v597, 2
    %v603 = vrot.slane %v598, 2
    %v605 = vsel %vm230, %v600, %v603
    %606 = vrot.lane.b32.xlu0 %v590, 64
    %v607 = vpop.permute.xlu0 %606
    %v609 = vsel %vm289, %v593, %v607
    %v610 = vsel %vm224, %v609, 0.0
    %v612 = vsel %vm292, %v610, 0
    %614 = vmatpush.msra.mxu0 0.0
    %615 = vmatpush.msra.mxu0 0.0
    %616 = vmatpush.msra.mxu0 0.0
    %617 = vmatpush.msra.mxu0 0.0
    %618 = vmatpush.msra.mxu0 0.0
    %619 = vmatpush.msra.mxu0 0.0
    %620 = vmatpush.msra.mxu0 0.0
    %621 = vmatpush.msra.mxu0 0.0
    %622 = vmatpush.msra.mxu0 %v216
    %623 = vmatpush.msra.mxu0 %v215
    %624 = vmatpush.msra.mxu0 %v214
    %625 = vmatpush.msra.mxu0 %v213
    %626 = vmatpush.msra.mxu0 %v212
    %627 = vmatpush.msra.mxu0 %v211
    %628 = vmatpush.msra.mxu0 %v210
    %629 = vmatpush.msra.mxu0 %v209
    %630 = vmatmul.f32.gmra.mxu0 %v612
    %v631 = vpop.f32.mrf.mxu0
    %v632 = vadd.f32 0.0, %v631
    %633 = vdwg.mxu0
    %v634 = vadd.f32 %v605, %v632
    %v635 = vxor.u32 %v634, 2147483648
    %v636 = vmul.f32 %v635, 1.442695
    %v637 = vpow.pop %v636
    %v638 = vadd.f32 %v637, 1.0
    %v639 = vrcp.pop %v638
    %v640 = vmul.f32 %v638, %v639
    %v641 = vsub.f32 1.0, %v640
    %v642 = vmul.f32 %v639, %v641
    %v643 = vadd.f32 %v639, %v642
    %vm644 = vweird.f32 %v638
    %vm645 = vweird.f32 %v639
    %vm646 = vmor %vm644, %vm645
    %v647 = vsel %vm646, %v639, %v643
    %v648 = vand.u32 2147483647, %v638
    %vm649 = vcmp.eq.f32.partialorder %v648, 8.507059e+37
    %v650 = vand.u32 %v638, 2147483648
    %v651 = vor.u32 1.1754944e-38, %v650
    %v652 = vsel %vm649, %v651, %v647
    %v653 = vmul.f32 1.0, %v652
    %v654 = vtanh.pop %v634
    %v655 = vmul.f32 %v653, %v584
    %657 = vrot.lane.b32.xlu0 %v654, 64
    %v658 = vpop.permute.xlu0 %657
    %v660 = vmul.f32 %v653, %v658
    %662 = vrot.lane.b32.xlu0 %v660, 32
    %v663 = vpop.permute.xlu0 %662
    %v665 = vadd.f32 %v655, %v663
    %v666 = vtanh.pop %v665
    %668 = vrot.lane.b32.xlu0 %v666, 64
    %v669 = vpop.permute.xlu0 %668
    %v671 = vmul.f32 %v653, %v669
    %673 = vrot.lane.b32.xlu0 %v671, 32
    %v674 = vpop.permute.xlu0 %673
    %676 = vst.msk [vmem:[#allocation3 + $0xa] sm:$0x3] %vm273, %v674
    %677 = vst.msk [vmem:[#allocation4 + $0x2] sm:$0xc] %vm275, %v674
    %v678 = vld [vmem:[#allocation2 + $0x10] sm:$0x30]
    %v679 = vld [vmem:[#allocation2 + $0x8] sm:$0xc]
    %v681 = vrot.slane %v678, 4
    %v683 = vsel %vm230, %v681, %v679
    %684 = vrot.lane.b32.xlu0 %v671, 64
    %v685 = vpop.permute.xlu0 %684
    %v687 = vsel %vm289, %v674, %v685
    %v688 = vsel %vm224, %v687, 0.0
    %v690 = vsel %vm292, %v688, 0
    %692 = vmatpush.msra.mxu0 0.0
    %693 = vmatpush.msra.mxu0 0.0
    %694 = vmatpush.msra.mxu0 0.0
    %695 = vmatpush.msra.mxu0 0.0
    %696 = vmatpush.msra.mxu0 0.0
    %697 = vmatpush.msra.mxu0 0.0
    %698 = vmatpush.msra.mxu0 0.0
    %699 = vmatpush.msra.mxu0 0.0
    %700 = vmatpush.msra.mxu0 %v216
    %701 = vmatpush.msra.mxu0 %v215
    %702 = vmatpush.msra.mxu0 %v214
    %703 = vmatpush.msra.mxu0 %v213
    %704 = vmatpush.msra.mxu0 %v212
    %705 = vmatpush.msra.mxu0 %v211
    %706 = vmatpush.msra.mxu0 %v210
    %707 = vmatpush.msra.mxu0 %v209
    %708 = vmatmul.f32.gmra.mxu0 %v690
    %v709 = vpop.f32.mrf.mxu0
    %v710 = vadd.f32 0.0, %v709
    %711 = vdwg.mxu0
    %v712 = vadd.f32 %v683, %v710
    %v713 = vxor.u32 %v712, 2147483648
    %v714 = vmul.f32 %v713, 1.442695
    %v715 = vpow.pop %v714
    %v716 = vadd.f32 %v715, 1.0
    %v717 = vrcp.pop %v716
    %v718 = vmul.f32 %v716, %v717
    %v719 = vsub.f32 1.0, %v718
    %v720 = vmul.f32 %v717, %v719
    %v721 = vadd.f32 %v717, %v720
    %vm722 = vweird.f32 %v716
    %vm723 = vweird.f32 %v717
    %vm724 = vmor %vm722, %vm723
    %v725 = vsel %vm724, %v717, %v721
    %v726 = vand.u32 2147483647, %v716
    %vm727 = vcmp.eq.f32.partialorder %v726, 8.507059e+37
    %v728 = vand.u32 %v716, 2147483648
    %v729 = vor.u32 1.1754944e-38, %v728
    %v730 = vsel %vm727, %v729, %v725
    %v731 = vmul.f32 1.0, %v730
    %v732 = vtanh.pop %v712
    %v733 = vmul.f32 %v731, %v665
    %735 = vrot.lane.b32.xlu0 %v732, 64
    %v736 = vpop.permute.xlu0 %735
    %v738 = vmul.f32 %v731, %v736
    %740 = vrot.lane.b32.xlu0 %v738, 32
    %v741 = vpop.permute.xlu0 %740
    %v743 = vadd.f32 %v733, %v741
    %v744 = vtanh.pop %v743
    %746 = vrot.lane.b32.xlu0 %v744, 64
    %v747 = vpop.permute.xlu0 %746
    %v749 = vmul.f32 %v731, %v747
    %751 = vrot.lane.b32.xlu0 %v749, 32
    %v752 = vpop.permute.xlu0 %751
    %754 = vst.msk [vmem:[#allocation3 + $0xc] sm:$0x3] %vm273, %v752
    %755 = vst.msk [vmem:[#allocation4] sm:$0xc] %vm275, %v752
    %v756 = vld [vmem:[#allocation2 + $0x10] sm:$0xc0]
    %v757 = vld [vmem:[#allocation2 + $0x8] sm:$0x3]
    %v759 = vrot.slane %v756, 6
    %v762 = vrot.slane %v757, 6
    %v764 = vsel %vm230, %v759, %v762
    %765 = vrot.lane.b32.xlu0 %v749, 64
    %v766 = vpop.permute.xlu0 %765
    %v768 = vsel %vm289, %v752, %v766
    %v769 = vsel %vm224, %v768, 0.0
    %v771 = vsel %vm292, %v769, 0
    %773 = vmatpush.msra.mxu0 0.0
    %774 = vmatpush.msra.mxu0 0.0
    %775 = vmatpush.msra.mxu0 0.0
    %776 = vmatpush.msra.mxu0 0.0
    %777 = vmatpush.msra.mxu0 0.0
    %778 = vmatpush.msra.mxu0 0.0
    %779 = vmatpush.msra.mxu0 0.0
    %780 = vmatpush.msra.mxu0 0.0
    %781 = vmatpush.msra.mxu0 %v216
    %782 = vmatpush.msra.mxu0 %v215
    %783 = vmatpush.msra.mxu0 %v214
    %784 = vmatpush.msra.mxu0 %v213
    %785 = vmatpush.msra.mxu0 %v212
    %786 = vmatpush.msra.mxu0 %v211
    %787 = vmatpush.msra.mxu0 %v210
    %788 = vmatpush.msra.mxu0 %v209
    %789 = vmatmul.f32.gmra.mxu0 %v771
    %v790 = vpop.f32.mrf.mxu0
    %v791 = vadd.f32 0.0, %v790
    %792 = vdwg.mxu0
    %v793 = vadd.f32 %v764, %v791
    %v794 = vxor.u32 %v793, 2147483648
    %v795 = vmul.f32 %v794, 1.442695
    %v796 = vpow.pop %v795
    %v797 = vadd.f32 %v796, 1.0
    %v798 = vrcp.pop %v797
    %v799 = vmul.f32 %v797, %v798
    %v800 = vsub.f32 1.0, %v799
    %v801 = vmul.f32 %v798, %v800
    %v802 = vadd.f32 %v798, %v801
    %vm803 = vweird.f32 %v797
    %vm804 = vweird.f32 %v798
    %vm805 = vmor %vm803, %vm804
    %v806 = vsel %vm805, %v798, %v802
    %v807 = vand.u32 2147483647, %v797
    %vm808 = vcmp.eq.f32.partialorder %v807, 8.507059e+37
    %v809 = vand.u32 %v797, 2147483648
    %v810 = vor.u32 1.1754944e-38, %v809
    %v811 = vsel %vm808, %v810, %v806
    %v812 = vmul.f32 1.0, %v811
    %v813 = vtanh.pop %v793
    %v814 = vmul.f32 %v812, %v743
    %816 = vrot.lane.b32.xlu0 %v813, 64
    %v817 = vpop.permute.xlu0 %816
    %v819 = vmul.f32 %v812, %v817
    %821 = vrot.lane.b32.xlu0 %v819, 32
    %v822 = vpop.permute.xlu0 %821
    %v824 = vadd.f32 %v814, %v822
    %v825 = vtanh.pop %v824
    %827 = vrot.lane.b32.xlu0 %v825, 64
    %v828 = vpop.permute.xlu0 %827
    %v830 = vmul.f32 %v812, %v828
    %832 = vrot.lane.b32.xlu0 %v830, 32
    %v833 = vpop.permute.xlu0 %832
    %835 = vst.msk [vmem:[#allocation3 + $0xe] sm:$0x3] %vm273, %v833
    %836 = vst.msk [vmem:[#allocation4 - $0x2] sm:$0xc] %vm275, %v833
    %v837 = vld [vmem:[#allocation3] sm:$0xff]
    %v838 = vld [vmem:[#allocation3 + $0x8] sm:$0xff]
    %v839 = vld [vmem:[#allocation4] sm:$0xff]
    %v840 = vld [vmem:[#allocation4 + $0x8] sm:$0xff]
    %843 = vrot.lane.b32.xlu0 %v839, 32
    %v844 = vpop.permute.xlu0 %843
    %845 = vrot.lane.b32.xlu0 %v840, 32
    %v846 = vpop.permute.xlu0 %845
    %v849 = vsel %vm289, %v837, %v844
    %v850 = vsel %vm289, %v838, %v846
    %v851 = vld [vmem:[#allocation14] sm:$0xff]
    %v852 = vld [vmem:[#allocation14 + $0x8] sm:$0xff]
    %v853 = vld [vmem:[#allocation14 + $0x10] sm:$0xff]
    %v854 = vld [vmem:[#allocation14 + $0x18] sm:$0xff]
    %v855 = vld [vmem:[#allocation14 + $0x20] sm:$0xff]
    %v856 = vld [vmem:[#allocation14 + $0x28] sm:$0xff]
    %v857 = vld [vmem:[#allocation14 + $0x30] sm:$0xff]
    %v858 = vld [vmem:[#allocation14 + $0x38] sm:$0xff]
    %v859 = vld [vmem:[#allocation14 + $0x40] sm:$0xff]
    %v860 = vld [vmem:[#allocation14 + $0x48] sm:$0xff]
    %v861 = vld [vmem:[#allocation14 + $0x50] sm:$0xff]
    %v862 = vld [vmem:[#allocation14 + $0x58] sm:$0xff]
    %v863 = vld [vmem:[#allocation14 + $0x60] sm:$0xff]
    %v864 = vld [vmem:[#allocation14 + $0x68] sm:$0xff]
    %v865 = vld [vmem:[#allocation14 + $0x70] sm:$0xff]
    %v866 = vld [vmem:[#allocation14 + $0x78] sm:$0xff]
    %v867 = vld [vmem:[%s5] sm:$0x3]
    %v869 = vperm.slane %v867, 0
    %v870 = vperm.slane %v867, 1
    %v874 = vsel %vm292, %v849, 0
    %v877 = vsel %vm292, %v850, 0
    %879 = vmatpush.msra.mxu0 0.0
    %880 = vmatpush.msra.mxu0 0.0
    %881 = vmatpush.msra.mxu0 0.0
    %882 = vmatpush.msra.mxu0 0.0
    %883 = vmatpush.msra.mxu0 0.0
    %884 = vmatpush.msra.mxu0 0.0
    %885 = vmatpush.msra.mxu0 0.0
    %886 = vmatpush.msra.mxu0 0.0
    %887 = vmatpush.msra.mxu0 %v865
    %888 = vmatpush.msra.mxu0 %v863
    %889 = vmatpush.msra.mxu0 %v861
    %890 = vmatpush.msra.mxu0 %v859
    %891 = vmatpush.msra.mxu0 %v857
    %892 = vmatpush.msra.mxu0 %v855
    %893 = vmatpush.msra.mxu0 %v853
    %894 = vmatpush.msra.mxu0 %v851
    %895 = vmatmul.f32.gmra.mxu0 %v874
    %v896 = vpop.f32.mrf.mxu0
    %v897 = vadd.f32 %v869, %v896
    %898 = vmatmul.f32.gmra.mxu0 %v877
    %v899 = vpop.f32.mrf.mxu0
    %v900 = vadd.f32 %v869, %v899
    %901 = vdwg.mxu0
    %902 = vmatpush.msra.mxu0 0.0
    %903 = vmatpush.msra.mxu0 0.0
    %904 = vmatpush.msra.mxu0 0.0
    %905 = vmatpush.msra.mxu0 0.0
    %906 = vmatpush.msra.mxu0 0.0
    %907 = vmatpush.msra.mxu0 0.0
    %908 = vmatpush.msra.mxu0 0.0
    %909 = vmatpush.msra.mxu0 0.0
    %910 = vmatpush.msra.mxu0 %v866
    %911 = vmatpush.msra.mxu0 %v864
    %912 = vmatpush.msra.mxu0 %v862
    %913 = vmatpush.msra.mxu0 %v860
    %914 = vmatpush.msra.mxu0 %v858
    %915 = vmatpush.msra.mxu0 %v856
    %916 = vmatpush.msra.mxu0 %v854
    %917 = vmatpush.msra.mxu0 %v852
    %918 = vmatmul.f32.gmra.mxu0 %v874
    %v919 = vpop.f32.mrf.mxu0
    %v920 = vadd.f32 %v870, %v919
    %921 = vmatmul.f32.gmra.mxu0 %v877
    %v922 = vpop.f32.mrf.mxu0
    %v923 = vadd.f32 %v870, %v922
    %924 = vdwg.mxu0
    %925 = vst [vmem:[#allocation5] sm:$0xff] %v897
    %926 = vst [vmem:[#allocation5 + $0x8] sm:$0xff] %v920
    %927 = vst [vmem:[#allocation5 + $0x10] sm:$0xff] %v900
    %928 = vst [vmem:[#allocation5 + $0x18] sm:$0xff] %v923
    %v929 = vld [vmem:[#allocation5 + $0x18] sm:$0xc0]
    %v930 = vxor.u32 %v929, 2147483648
    %v931 = vmul.f32 %v930, 1.442695
    %v932 = vpow.pop %v931
    %v933 = vadd.f32 %v932, 1.0
    %v934 = vrcp.pop %v933
    %v935 = vmul.f32 %v933, %v934
    %v936 = vsub.f32 1.0, %v935
    %v937 = vmul.f32 %v934, %v936
    %v938 = vadd.f32 %v934, %v937
    %vm939 = vweird.f32 %v933
    %vm940 = vweird.f32 %v934
    %vm941 = vmor %vm939, %vm940
    %v942 = vsel %vm941, %v934, %v938
    %v943 = vand.u32 2147483647, %v933
    %vm944 = vcmp.eq.f32.partialorder %v943, 8.507059e+37
    %v945 = vand.u32 %v933, 2147483648
    %v946 = vor.u32 1.1754944e-38, %v945
    %v947 = vsel %vm944, %v946, %v942
    %v948 = vmul.f32 1.0, %v947
    %v949 = vtanh.pop %v929
    %v950 = vmul.f32 %v948, 0.0
    %952 = vrot.lane.b32.xlu0 %v949, 64
    %v953 = vpop.permute.xlu0 %952
    %v955 = vmul.f32 %v948, %v953
    %957 = vrot.lane.b32.xlu0 %v955, 32
    %v958 = vpop.permute.xlu0 %957
    %v960 = vadd.f32 %v950, %v958
    %v961 = vtanh.pop %v960
    %963 = vrot.lane.b32.xlu0 %v961, 64
    %v964 = vpop.permute.xlu0 %963
    %v966 = vmul.f32 %v948, %v964
    %v967 = vld [vmem:[#allocation15] sm:$0xff]
    %v968 = vld [vmem:[#allocation15 + $0x8] sm:$0xff]
    %v969 = vld [vmem:[#allocation15 + $0x10] sm:$0xff]
    %v970 = vld [vmem:[#allocation15 + $0x18] sm:$0xff]
    %v971 = vld [vmem:[#allocation5] sm:$0x3]
    %v972 = vxor.u32 %v971, 2147483648
    %v973 = vmul.f32 %v972, 1.442695
    %v974 = vpow.pop %v973
    %v975 = vadd.f32 %v974, 1.0
    %v976 = vrcp.pop %v975
    %v977 = vmul.f32 %v975, %v976
    %v978 = vsub.f32 1.0, %v977
    %v979 = vmul.f32 %v976, %v978
    %v980 = vadd.f32 %v976, %v979
    %vm981 = vweird.f32 %v975
    %vm982 = vweird.f32 %v976
    %vm983 = vmor %vm981, %vm982
    %v984 = vsel %vm983, %v976, %v980
    %v985 = vand.u32 2147483647, %v975
    %vm986 = vcmp.eq.f32.partialorder %v985, 8.507059e+37
    %v987 = vand.u32 %v975, 2147483648
    %v988 = vor.u32 1.1754944e-38, %v987
    %v989 = vsel %vm986, %v988, %v984
    %v990 = vmul.f32 1.0, %v989
    %v991 = vtanh.pop %v971
    %v992 = vmul.f32 %v990, 0.0
    %994 = vrot.lane.b32.xlu0 %v991, 64
    %v995 = vpop.permute.xlu0 %994
    %v997 = vmul.f32 %v990, %v995
    %999 = vrot.lane.b32.xlu0 %v997, 32
    %v1000 = vpop.permute.xlu0 %999
    %v1002 = vadd.f32 %v992, %v1000
    %v1003 = vtanh.pop %v1002
    %1005 = vrot.lane.b32.xlu0 %v1003, 64
    %v1006 = vpop.permute.xlu0 %1005
    %v1008 = vmul.f32 %v990, %v1006
    %v1009 = vld [vmem:[#allocation5] sm:$0xc]
    %1011 = vrot.lane.b32.xlu0 %v1008, 32
    %v1012 = vpop.permute.xlu0 %1011
    %v1013 = vsel %vm289, %v1012, 0
    %1015 = vmatpush.msra.mxu0 0.0
    %1016 = vmatpush.msra.mxu0 0.0
    %1017 = vmatpush.msra.mxu0 0.0
    %1018 = vmatpush.msra.mxu0 0.0
    %1019 = vmatpush.msra.mxu0 0.0
    %1020 = vmatpush.msra.mxu0 0.0
    %1021 = vmatpush.msra.mxu0 0.0
    %1022 = vmatpush.msra.mxu0 0.0
    %1023 = vmatpush.msra.mxu0 0.0
    %1024 = vmatpush.msra.mxu0 0.0
    %1025 = vmatpush.msra.mxu0 0.0
    %1026 = vmatpush.msra.mxu0 0.0
    %1027 = vmatpush.msra.mxu0 %v970
    %1028 = vmatpush.msra.mxu0 %v969
    %1029 = vmatpush.msra.mxu0 %v968
    %1030 = vmatpush.msra.mxu0 %v967
    %1031 = vmatmul.f32.gmra.mxu0 %v1013
    %v1032 = vpop.f32.mrf.mxu0
    %v1033 = vadd.f32 0.0, %v1032
    %1034 = vdwg.mxu0
    %v1036 = vrot.slane %v1033, 6
    %v1038 = vadd.f32 %v1009, %v1036
    %v1039 = vxor.u32 %v1038, 2147483648
    %v1040 = vmul.f32 %v1039, 1.442695
    %v1041 = vpow.pop %v1040
    %v1042 = vadd.f32 %v1041, 1.0
    %v1043 = vrcp.pop %v1042
    %v1044 = vmul.f32 %v1042, %v1043
    %v1045 = vsub.f32 1.0, %v1044
    %v1046 = vmul.f32 %v1043, %v1045
    %v1047 = vadd.f32 %v1043, %v1046
    %vm1048 = vweird.f32 %v1042
    %vm1049 = vweird.f32 %v1043
    %vm1050 = vmor %vm1048, %vm1049
    %v1051 = vsel %vm1050, %v1043, %v1047
    %v1052 = vand.u32 2147483647, %v1042
    %vm1053 = vcmp.eq.f32.partialorder %v1052, 8.507059e+37
    %v1054 = vand.u32 %v1042, 2147483648
    %v1055 = vor.u32 1.1754944e-38, %v1054
    %v1056 = vsel %vm1053, %v1055, %v1051
    %v1057 = vmul.f32 1.0, %v1056
    %v1058 = vtanh.pop %v1038
    %v1060 = vrot.slane %v1002, 6
    %v1062 = vmul.f32 %v1057, %v1060
    %1064 = vrot.lane.b32.xlu0 %v1058, 64
    %v1065 = vpop.permute.xlu0 %1064
    %v1067 = vmul.f32 %v1057, %v1065
    %1069 = vrot.lane.b32.xlu0 %v1067, 32
    %v1070 = vpop.permute.xlu0 %1069
    %v1072 = vadd.f32 %v1062, %v1070
    %v1073 = vtanh.pop %v1072
    %1075 = vrot.lane.b32.xlu0 %v1073, 64
    %v1076 = vpop.permute.xlu0 %1075
    %v1078 = vmul.f32 %v1057, %v1076
    %v1079 = vld [vmem:[#allocation5] sm:$0x30]
    %v1081 = vrot.slane %v1078, 2
    %1082 = vrot.lane.b32.xlu0 %v1081, 32
    %v1083 = vpop.permute.xlu0 %1082
    %v1084 = vsel %vm289, %v1083, 0
    %1086 = vmatpush.msra.mxu0 0.0
    %1087 = vmatpush.msra.mxu0 0.0
    %1088 = vmatpush.msra.mxu0 0.0
    %1089 = vmatpush.msra.mxu0 0.0
    %1090 = vmatpush.msra.mxu0 0.0
    %1091 = vmatpush.msra.mxu0 0.0
    %1092 = vmatpush.msra.mxu0 0.0
    %1093 = vmatpush.msra.mxu0 0.0
    %1094 = vmatpush.msra.mxu0 0.0
    %1095 = vmatpush.msra.mxu0 0.0
    %1096 = vmatpush.msra.mxu0 0.0
    %1097 = vmatpush.msra.mxu0 0.0
    %1098 = vmatpush.msra.mxu0 %v970
    %1099 = vmatpush.msra.mxu0 %v969
    %1100 = vmatpush.msra.mxu0 %v968
    %1101 = vmatpush.msra.mxu0 %v967
    %1102 = vmatmul.f32.gmra.mxu0 %v1084
    %v1103 = vpop.f32.mrf.mxu0
    %v1104 = vadd.f32 0.0, %v1103
    %1105 = vdwg.mxu0
    %v1107 = vrot.slane %v1104, 4
    %v1109 = vadd.f32 %v1079, %v1107
    %v1110 = vxor.u32 %v1109, 2147483648
    %v1111 = vmul.f32 %v1110, 1.442695
    %v1112 = vpow.pop %v1111
    %v1113 = vadd.f32 %v1112, 1.0
    %v1114 = vrcp.pop %v1113
    %v1115 = vmul.f32 %v1113, %v1114
    %v1116 = vsub.f32 1.0, %v1115
    %v1117 = vmul.f32 %v1114, %v1116
    %v1118 = vadd.f32 %v1114, %v1117
    %vm1119 = vweird.f32 %v1113
    %vm1120 = vweird.f32 %v1114
    %vm1121 = vmor %vm1119, %vm1120
    %v1122 = vsel %vm1121, %v1114, %v1118
    %v1123 = vand.u32 2147483647, %v1113
    %vm1124 = vcmp.eq.f32.partialorder %v1123, 8.507059e+37
    %v1125 = vand.u32 %v1113, 2147483648
    %v1126 = vor.u32 1.1754944e-38, %v1125
    %v1127 = vsel %vm1124, %v1126, %v1122
    %v1128 = vmul.f32 1.0, %v1127
    %v1129 = vtanh.pop %v1109
    %v1131 = vrot.slane %v1072, 6
    %v1133 = vmul.f32 %v1128, %v1131
    %1135 = vrot.lane.b32.xlu0 %v1129, 64
    %v1136 = vpop.permute.xlu0 %1135
    %v1138 = vmul.f32 %v1128, %v1136
    %1140 = vrot.lane.b32.xlu0 %v1138, 32
    %v1141 = vpop.permute.xlu0 %1140
    %v1143 = vadd.f32 %v1133, %v1141
    %v1144 = vtanh.pop %v1143
    %1146 = vrot.lane.b32.xlu0 %v1144, 64
    %v1147 = vpop.permute.xlu0 %1146
    %v1149 = vmul.f32 %v1128, %v1147
    %v1150 = vld [vmem:[#allocation5] sm:$0xc0]
    %v1152 = vrot.slane %v1149, 4
    %1153 = vrot.lane.b32.xlu0 %v1152, 32
    %v1154 = vpop.permute.xlu0 %1153
    %v1155 = vsel %vm289, %v1154, 0
    %1157 = vmatpush.msra.mxu0 0.0
    %1158 = vmatpush.msra.mxu0 0.0
    %1159 = vmatpush.msra.mxu0 0.0
    %1160 = vmatpush.msra.mxu0 0.0
    %1161 = vmatpush.msra.mxu0 0.0
    %1162 = vmatpush.msra.mxu0 0.0
    %1163 = vmatpush.msra.mxu0 0.0
    %1164 = vmatpush.msra.mxu0 0.0
    %1165 = vmatpush.msra.mxu0 0.0
    %1166 = vmatpush.msra.mxu0 0.0
    %1167 = vmatpush.msra.mxu0 0.0
    %1168 = vmatpush.msra.mxu0 0.0
    %1169 = vmatpush.msra.mxu0 %v970
    %1170 = vmatpush.msra.mxu0 %v969
    %1171 = vmatpush.msra.mxu0 %v968
    %1172 = vmatpush.msra.mxu0 %v967
    %1173 = vmatmul.f32.gmra.mxu0 %v1155
    %v1174 = vpop.f32.mrf.mxu0
    %v1175 = vadd.f32 0.0, %v1174
    %1176 = vdwg.mxu0
    %v1178 = vrot.slane %v1175, 2
    %v1180 = vadd.f32 %v1150, %v1178
    %v1181 = vxor.u32 %v1180, 2147483648
    %v1182 = vmul.f32 %v1181, 1.442695
    %v1183 = vpow.pop %v1182
    %v1184 = vadd.f32 %v1183, 1.0
    %v1185 = vrcp.pop %v1184
    %v1186 = vmul.f32 %v1184, %v1185
    %v1187 = vsub.f32 1.0, %v1186
    %v1188 = vmul.f32 %v1185, %v1187
    %v1189 = vadd.f32 %v1185, %v1188
    %vm1190 = vweird.f32 %v1184
    %vm1191 = vweird.f32 %v1185
    %vm1192 = vmor %vm1190, %vm1191
    %v1193 = vsel %vm1192, %v1185, %v1189
    %v1194 = vand.u32 2147483647, %v1184
    %vm1195 = vcmp.eq.f32.partialorder %v1194, 8.507059e+37
    %v1196 = vand.u32 %v1184, 2147483648
    %v1197 = vor.u32 1.1754944e-38, %v1196
    %v1198 = vsel %vm1195, %v1197, %v1193
    %v1199 = vmul.f32 1.0, %v1198
    %v1200 = vtanh.pop %v1180
    %v1202 = vrot.slane %v1143, 6
    %v1204 = vmul.f32 %v1199, %v1202
    %1206 = vrot.lane.b32.xlu0 %v1200, 64
    %v1207 = vpop.permute.xlu0 %1206
    %v1209 = vmul.f32 %v1199, %v1207
    %1211 = vrot.lane.b32.xlu0 %v1209, 32
    %v1212 = vpop.permute.xlu0 %1211
    %v1214 = vadd.f32 %v1204, %v1212
    %v1215 = vtanh.pop %v1214
    %1217 = vrot.lane.b32.xlu0 %v1215, 64
    %v1218 = vpop.permute.xlu0 %1217
    %v1220 = vmul.f32 %v1199, %v1218
    %v1221 = vld [vmem:[#allocation5 + $0x10] sm:$0x3]
    %v1223 = vrot.slane %v1220, 6
    %1224 = vrot.lane.b32.xlu0 %v1223, 32
    %v1225 = vpop.permute.xlu0 %1224
    %v1226 = vsel %vm289, %v1225, 0
    %1228 = vmatpush.msra.mxu0 0.0
    %1229 = vmatpush.msra.mxu0 0.0
    %1230 = vmatpush.msra.mxu0 0.0
    %1231 = vmatpush.msra.mxu0 0.0
    %1232 = vmatpush.msra.mxu0 0.0
    %1233 = vmatpush.msra.mxu0 0.0
    %1234 = vmatpush.msra.mxu0 0.0
    %1235 = vmatpush.msra.mxu0 0.0
    %1236 = vmatpush.msra.mxu0 0.0
    %1237 = vmatpush.msra.mxu0 0.0
    %1238 = vmatpush.msra.mxu0 0.0
    %1239 = vmatpush.msra.mxu0 0.0
    %1240 = vmatpush.msra.mxu0 %v970
    %1241 = vmatpush.msra.mxu0 %v969
    %1242 = vmatpush.msra.mxu0 %v968
    %1243 = vmatpush.msra.mxu0 %v967
    %1244 = vmatmul.f32.gmra.mxu0 %v1226
    %v1245 = vpop.f32.mrf.mxu0
    %v1246 = vadd.f32 0.0, %v1245
    %1247 = vdwg.mxu0
    %v1248 = vadd.f32 %v1221, %v1246
    %v1249 = vxor.u32 %v1248, 2147483648
    %v1250 = vmul.f32 %v1249, 1.442695
    %v1251 = vpow.pop %v1250
    %v1252 = vadd.f32 %v1251, 1.0
    %v1253 = vrcp.pop %v1252
    %v1254 = vmul.f32 %v1252, %v1253
    %v1255 = vsub.f32 1.0, %v1254
    %v1256 = vmul.f32 %v1253, %v1255
    %v1257 = vadd.f32 %v1253, %v1256
    %vm1258 = vweird.f32 %v1252
    %vm1259 = vweird.f32 %v1253
    %vm1260 = vmor %vm1258, %vm1259
    %v1261 = vsel %vm1260, %v1253, %v1257
    %v1262 = vand.u32 2147483647, %v1252
    %vm1263 = vcmp.eq.f32.partialorder %v1262, 8.507059e+37
    %v1264 = vand.u32 %v1252, 2147483648
    %v1265 = vor.u32 1.1754944e-38, %v1264
    %v1266 = vsel %vm1263, %v1265, %v1261
    %v1267 = vmul.f32 1.0, %v1266
    %v1268 = vtanh.pop %v1248
    %v1270 = vrot.slane %v1214, 6
    %v1272 = vmul.f32 %v1267, %v1270
    %1274 = vrot.lane.b32.xlu0 %v1268, 64
    %v1275 = vpop.permute.xlu0 %1274
    %v1277 = vmul.f32 %v1267, %v1275
    %1279 = vrot.lane.b32.xlu0 %v1277, 32
    %v1280 = vpop.permute.xlu0 %1279
    %v1282 = vadd.f32 %v1272, %v1280
    %v1283 = vtanh.pop %v1282
    %1285 = vrot.lane.b32.xlu0 %v1283, 64
    %v1286 = vpop.permute.xlu0 %1285
    %v1288 = vmul.f32 %v1267, %v1286
    %v1289 = vld [vmem:[#allocation5 + $0x10] sm:$0xc]
    %1291 = vrot.lane.b32.xlu0 %v1288, 32
    %v1292 = vpop.permute.xlu0 %1291
    %v1293 = vsel %vm289, %v1292, 0
    %1295 = vmatpush.msra.mxu0 0.0
    %1296 = vmatpush.msra.mxu0 0.0
    %1297 = vmatpush.msra.mxu0 0.0
    %1298 = vmatpush.msra.mxu0 0.0
    %1299 = vmatpush.msra.mxu0 0.0
    %1300 = vmatpush.msra.mxu0 0.0
    %1301 = vmatpush.msra.mxu0 0.0
    %1302 = vmatpush.msra.mxu0 0.0
    %1303 = vmatpush.msra.mxu0 0.0
    %1304 = vmatpush.msra.mxu0 0.0
    %1305 = vmatpush.msra.mxu0 0.0
    %1306 = vmatpush.msra.mxu0 0.0
    %1307 = vmatpush.msra.mxu0 %v970
    %1308 = vmatpush.msra.mxu0 %v969
    %1309 = vmatpush.msra.mxu0 %v968
    %1310 = vmatpush.msra.mxu0 %v967
    %1311 = vmatmul.f32.gmra.mxu0 %v1293
    %v1312 = vpop.f32.mrf.mxu0
    %v1313 = vadd.f32 0.0, %v1312
    %1314 = vdwg.mxu0
    %v1316 = vrot.slane %v1313, 6
    %v1318 = vadd.f32 %v1289, %v1316
    %v1319 = vxor.u32 %v1318, 2147483648
    %v1320 = vmul.f32 %v1319, 1.442695
    %v1321 = vpow.pop %v1320
    %v1322 = vadd.f32 %v1321, 1.0
    %v1323 = vrcp.pop %v1322
    %v1324 = vmul.f32 %v1322, %v1323
    %v1325 = vsub.f32 1.0, %v1324
    %v1326 = vmul.f32 %v1323, %v1325
    %v1327 = vadd.f32 %v1323, %v1326
    %vm1328 = vweird.f32 %v1322
    %vm1329 = vweird.f32 %v1323
    %vm1330 = vmor %vm1328, %vm1329
    %v1331 = vsel %vm1330, %v1323, %v1327
    %v1332 = vand.u32 2147483647, %v1322
    %vm1333 = vcmp.eq.f32.partialorder %v1332, 8.507059e+37
    %v1334 = vand.u32 %v1322, 2147483648
    %v1335 = vor.u32 1.1754944e-38, %v1334
    %v1336 = vsel %vm1333, %v1335, %v1331
    %v1337 = vmul.f32 1.0, %v1336
    %v1338 = vtanh.pop %v1318
    %v1340 = vrot.slane %v1282, 6
    %v1342 = vmul.f32 %v1337, %v1340
    %1344 = vrot.lane.b32.xlu0 %v1338, 64
    %v1345 = vpop.permute.xlu0 %1344
    %v1347 = vmul.f32 %v1337, %v1345
    %1349 = vrot.lane.b32.xlu0 %v1347, 32
    %v1350 = vpop.permute.xlu0 %1349
    %v1352 = vadd.f32 %v1342, %v1350
    %v1353 = vtanh.pop %v1352
    %1355 = vrot.lane.b32.xlu0 %v1353, 64
    %v1356 = vpop.permute.xlu0 %1355
    %v1358 = vmul.f32 %v1337, %v1356
    %v1359 = vld [vmem:[#allocation5 + $0x10] sm:$0x30]
    %v1361 = vrot.slane %v1358, 2
    %1362 = vrot.lane.b32.xlu0 %v1361, 32
    %v1363 = vpop.permute.xlu0 %1362
    %v1364 = vsel %vm289, %v1363, 0
    %1366 = vmatpush.msra.mxu0 0.0
    %1367 = vmatpush.msra.mxu0 0.0
    %1368 = vmatpush.msra.mxu0 0.0
    %1369 = vmatpush.msra.mxu0 0.0
    %1370 = vmatpush.msra.mxu0 0.0
    %1371 = vmatpush.msra.mxu0 0.0
    %1372 = vmatpush.msra.mxu0 0.0
    %1373 = vmatpush.msra.mxu0 0.0
    %1374 = vmatpush.msra.mxu0 0.0
    %1375 = vmatpush.msra.mxu0 0.0
    %1376 = vmatpush.msra.mxu0 0.0
    %1377 = vmatpush.msra.mxu0 0.0
    %1378 = vmatpush.msra.mxu0 %v970
    %1379 = vmatpush.msra.mxu0 %v969
    %1380 = vmatpush.msra.mxu0 %v968
    %1381 = vmatpush.msra.mxu0 %v967
    %1382 = vmatmul.f32.gmra.mxu0 %v1364
    %v1383 = vpop.f32.mrf.mxu0
    %v1384 = vadd.f32 0.0, %v1383
    %1385 = vdwg.mxu0
    %v1387 = vrot.slane %v1384, 4
    %v1389 = vadd.f32 %v1359, %v1387
    %v1390 = vxor.u32 %v1389, 2147483648
    %v1391 = vmul.f32 %v1390, 1.442695
    %v1392 = vpow.pop %v1391
    %v1393 = vadd.f32 %v1392, 1.0
    %v1394 = vrcp.pop %v1393
    %v1395 = vmul.f32 %v1393, %v1394
    %v1396 = vsub.f32 1.0, %v1395
    %v1397 = vmul.f32 %v1394, %v1396
    %v1398 = vadd.f32 %v1394, %v1397
    %vm1399 = vweird.f32 %v1393
    %vm1400 = vweird.f32 %v1394
    %vm1401 = vmor %vm1399, %vm1400
    %v1402 = vsel %vm1401, %v1394, %v1398
    %v1403 = vand.u32 2147483647, %v1393
    %vm1404 = vcmp.eq.f32.partialorder %v1403, 8.507059e+37
    %v1405 = vand.u32 %v1393, 2147483648
    %v1406 = vor.u32 1.1754944e-38, %v1405
    %v1407 = vsel %vm1404, %v1406, %v1402
    %v1408 = vmul.f32 1.0, %v1407
    %v1409 = vtanh.pop %v1389
    %v1411 = vrot.slane %v1352, 6
    %v1413 = vmul.f32 %v1408, %v1411
    %1415 = vrot.lane.b32.xlu0 %v1409, 64
    %v1416 = vpop.permute.xlu0 %1415
    %v1418 = vmul.f32 %v1408, %v1416
    %1420 = vrot.lane.b32.xlu0 %v1418, 32
    %v1421 = vpop.permute.xlu0 %1420
    %v1423 = vadd.f32 %v1413, %v1421
    %v1424 = vtanh.pop %v1423
    %1426 = vrot.lane.b32.xlu0 %v1424, 64
    %v1427 = vpop.permute.xlu0 %1426
    %v1429 = vmul.f32 %v1408, %v1427
    %v1430 = vld [vmem:[#allocation5 + $0x10] sm:$0xc0]
    %v1432 = vrot.slane %v1429, 4
    %1433 = vrot.lane.b32.xlu0 %v1432, 32
    %v1434 = vpop.permute.xlu0 %1433
    %v1435 = vsel %vm289, %v1434, 0
    %1437 = vmatpush.msra.mxu0 0.0
    %1438 = vmatpush.msra.mxu0 0.0
    %1439 = vmatpush.msra.mxu0 0.0
    %1440 = vmatpush.msra.mxu0 0.0
    %1441 = vmatpush.msra.mxu0 0.0
    %1442 = vmatpush.msra.mxu0 0.0
    %1443 = vmatpush.msra.mxu0 0.0
    %1444 = vmatpush.msra.mxu0 0.0
    %1445 = vmatpush.msra.mxu0 0.0
    %1446 = vmatpush.msra.mxu0 0.0
    %1447 = vmatpush.msra.mxu0 0.0
    %1448 = vmatpush.msra.mxu0 0.0
    %1449 = vmatpush.msra.mxu0 %v970
    %1450 = vmatpush.msra.mxu0 %v969
    %1451 = vmatpush.msra.mxu0 %v968
    %1452 = vmatpush.msra.mxu0 %v967
    %1453 = vmatmul.f32.gmra.mxu0 %v1435
    %v1454 = vpop.f32.mrf.mxu0
    %v1455 = vadd.f32 0.0, %v1454
    %1456 = vdwg.mxu0
    %v1458 = vrot.slane %v1455, 2
    %v1460 = vadd.f32 %v1430, %v1458
    %v1461 = vxor.u32 %v1460, 2147483648
    %v1462 = vmul.f32 %v1461, 1.442695
    %v1463 = vpow.pop %v1462
    %v1464 = vadd.f32 %v1463, 1.0
    %v1465 = vrcp.pop %v1464
    %v1466 = vmul.f32 %v1464, %v1465
    %v1467 = vsub.f32 1.0, %v1466
    %v1468 = vmul.f32 %v1465, %v1467
    %v1469 = vadd.f32 %v1465, %v1468
    %vm1470 = vweird.f32 %v1464
    %vm1471 = vweird.f32 %v1465
    %vm1472 = vmor %vm1470, %vm1471
    %v1473 = vsel %vm1472, %v1465, %v1469
    %v1474 = vand.u32 2147483647, %v1464
    %vm1475 = vcmp.eq.f32.partialorder %v1474, 8.507059e+37
    %v1476 = vand.u32 %v1464, 2147483648
    %v1477 = vor.u32 1.1754944e-38, %v1476
    %v1478 = vsel %vm1475, %v1477, %v1473
    %v1479 = vmul.f32 1.0, %v1478
    %v1480 = vtanh.pop %v1460
    %v1482 = vrot.slane %v1423, 6
    %v1484 = vmul.f32 %v1479, %v1482
    %1486 = vrot.lane.b32.xlu0 %v1480, 64
    %v1487 = vpop.permute.xlu0 %1486
    %v1489 = vmul.f32 %v1479, %v1487
    %1491 = vrot.lane.b32.xlu0 %v1489, 32
    %v1492 = vpop.permute.xlu0 %1491
    %v1494 = vadd.f32 %v1484, %v1492
    %v1495 = vtanh.pop %v1494
    %1497 = vrot.lane.b32.xlu0 %v1495, 64
    %v1498 = vpop.permute.xlu0 %1497
    %v1500 = vmul.f32 %v1479, %v1498
    %v1501 = vld [vmem:[#allocation17] sm:$0xff]
    %v1502 = vld [vmem:[#allocation17 + $0x8] sm:$0xff]
    %v1503 = vld [vmem:[#allocation17 + $0x10] sm:$0xff]
    %v1504 = vld [vmem:[#allocation17 + $0x18] sm:$0xff]
    %v1505 = vld [vmem:[#allocation17 + $0x20] sm:$0xff]
    %v1506 = vld [vmem:[#allocation17 + $0x28] sm:$0xff]
    %v1507 = vld [vmem:[#allocation17 + $0x30] sm:$0xff]
    %v1508 = vld [vmem:[#allocation17 + $0x38] sm:$0xff]
    %v1510 = vrot.slane %v966, 6
    %1511 = vrot.lane.b32.xlu0 %v1510, 32
    %v1512 = vpop.permute.xlu0 %1511
    %v1513 = vsel %vm289, %v1512, 0
    %1515 = vmatpush.msra.mxu0 0.0
    %1516 = vmatpush.msra.mxu0 0.0
    %1517 = vmatpush.msra.mxu0 0.0
    %1518 = vmatpush.msra.mxu0 0.0
    %1519 = vmatpush.msra.mxu0 0.0
    %1520 = vmatpush.msra.mxu0 0.0
    %1521 = vmatpush.msra.mxu0 0.0
    %1522 = vmatpush.msra.mxu0 0.0
    %1523 = vmatpush.msra.mxu0 0.0
    %1524 = vmatpush.msra.mxu0 0.0
    %1525 = vmatpush.msra.mxu0 0.0
    %1526 = vmatpush.msra.mxu0 0.0
    %1527 = vmatpush.msra.mxu0 %v1508
    %1528 = vmatpush.msra.mxu0 %v1507
    %1529 = vmatpush.msra.mxu0 %v1506
    %1530 = vmatpush.msra.mxu0 %v1505
    %1531 = vmatmul.f32.gmra.mxu0 %v1513
    %v1532 = vpop.f32.mrf.mxu0
    %v1533 = vadd.f32 0.0, %v1532
    %1534 = vdwg.mxu0
    %v1536 = vrot.slane %v1500, 6
    %1537 = vrot.lane.b32.xlu0 %v1536, 32
    %v1538 = vpop.permute.xlu0 %1537
    %v1539 = vsel %vm289, %v1538, 0
    %1541 = vmatpush.msra.mxu0 0.0
    %1542 = vmatpush.msra.mxu0 0.0
    %1543 = vmatpush.msra.mxu0 0.0
    %1544 = vmatpush.msra.mxu0 0.0
    %1545 = vmatpush.msra.mxu0 0.0
    %1546 = vmatpush.msra.mxu0 0.0
    %1547 = vmatpush.msra.mxu0 0.0
    %1548 = vmatpush.msra.mxu0 0.0
    %1549 = vmatpush.msra.mxu0 0.0
    %1550 = vmatpush.msra.mxu0 0.0
    %1551 = vmatpush.msra.mxu0 0.0
    %1552 = vmatpush.msra.mxu0 0.0
    %1553 = vmatpush.msra.mxu0 %v1504
    %1554 = vmatpush.msra.mxu0 %v1503
    %1555 = vmatpush.msra.mxu0 %v1502
    %1556 = vmatpush.msra.mxu0 %v1501
    %1557 = vmatmul.f32.gmra.mxu0 %v1539
    %v1558 = vpop.f32.mrf.mxu0
    %v1559 = vadd.f32 %v1533, %v1558
    %1560 = vdwg.mxu0
    %v1561 = vld [vmem:[%s8] sm:$0x1]
    %v1563 = vperm.slane %v1561, 0
    %v1565 = vadd.f32 %v1559, %v1563
    %1566 = vst [vmem:[#allocation18] sm:$0x3] %v1565
    // Predicated region
    $region66: #{tpu_custom_call.1} parent=1 // pred_check
      _
    $region67: #{tpu_custom_call.1} parent=1 // pred_check_branch
      %1568 = sbr.rel (0) target = $region69
    $region68: #{tpu_custom_call.1} parent=1 // pred_region
      %1570 = vsyncadd [#allocation8], 0
      %s1572 = sshll.u32 [#allocation18], 4
      %s1573 = int_to_ptr.vmem [resolvable:$true] %s1572
      %s1574 = sshll.u32 %s9, 4
      %s1575 = int_to_ptr.hbm [resolvable:$true] %s1574
      %1577 = dma.vmem_to_hbm [thread:$0]  %s1573, 32, %s1575, [#allocation8]
    $region69: #{tpu_custom_call.1} parent=1 // pred_fallthru
      _
    // Predicated region
    $region70: #{tpu_custom_call.1} parent=1 // pred_check
      _
    $region71: #{tpu_custom_call.1} parent=1 // pred_check_branch
      %1579 = sbr.rel (0) target = $region73
    $region72: #{tpu_custom_call.1} parent=1 // pred_region
      %1581 = dma.done [#allocation8], 32
    $region73: #{tpu_custom_call.1} parent=1 // pred_fallthru
      _
    %1582 = vsyncpa [#allocation7], 1
    %1583 = vsyncpa [#allocation10], 1
    %1584 = vsyncpa [#allocation13], 1
    %1585 = vsyncpa [#allocation16], 1
    %1586 = vsyncpa [#allocation8], 1

</llo_original>
